<compile_context>
chip_gen: v6e
topology: v6e:2x2x1
jax: 0.10.0
libtpu: 0.0.40
codegen_flags: <defaults>
</compile_context>

<pallas_src>
import functools

import jax
import jax.numpy as jnp
from jax.experimental import pallas as pl
from jax.experimental.pallas import tpu as pltpu

HIDDEN = 512
IN_F = 2
OUT_F = 2
OUT_PAD = 128  # lane-dense output width (unmasked full-lane vst)


def _round_up(x, m):
    return ((x + m - 1) // m) * m


def _use_bf16_tanh():
    """bf16 EUP/VPU path exists on v6e/v7x; keep tanh in f32 on v2-v5."""
    try:
        kind = jax.devices()[0].device_kind.lower()
    except Exception:
        return False
    return not any(t in kind for t in ("v2", "v3", "v4", "v5"))


_BF16_TANH = _use_bf16_tanh()


def _choose_tm(B, tm_max=512, min_tiles=2):
    """Largest multiple-of-8 tile <= tm_max that minimizes batch padding,
    then halved (if possible) until the grid has >= min_tiles steps so the
    "parallel" batch axis can shard across both v7x TensorCores."""
    B = max(int(B), 1)
    cap = min(tm_max, _round_up(B, 8))
    best_tm, best_pad = 8, None
    for tm in range(8, cap + 1, 8):
        pad = _round_up(B, tm) - B
        if best_pad is None or pad < best_pad or (pad == best_pad and tm > best_tm):
            best_pad, best_tm = pad, tm
    tm = best_tm
    while (_round_up(B, tm) // tm) < min_tiles and tm > 8:
        tm = _round_up(tm // 2, 8)
    return tm


def generator_kernel(z_ref,
                     w1_ref, b1_ref,
                     w2_ref, b2_ref,
                     w3_ref, b3_ref,
                     w4_ref, b4_ref,
                     o_ref, *, bf16_tanh):
    z = z_ref[...]                                    # (TM, 2) f32
    w1 = w1_ref[...]                                  # (2, 512) f32

    # Layer 1: contraction dim is 2 -> VPU broadcast-FMAs, not a K-padded MXU pass.
    h = (z[:, 0:1] * w1[0:1, :]
         + z[:, 1:2] * w1[1:2, :]
         + b1_ref[...])                               # (TM, 512) f32

    if bf16_tanh:
        # v6e/v7x: bias add in f32, single cast to bf16, tanh on the bf16 EUP
        # path; the bf16 result feeds the next MXU pass directly.
        act = lambda x: jnp.tanh(x.astype(jnp.bfloat16))
    else:
        # v2-v5: tanh stays in f32 (no bf16 EUP); cast only for the MXU operand.
        act = lambda x: jnp.tanh(x).astype(jnp.bfloat16)

    h = act(h)                                        # (TM, 512) bf16

    # Layers 2-3: bf16 MXU operands, f32 accumulation, f32 bias add.
    h = act(jnp.dot(h, w2_ref[...], preferred_element_type=jnp.float32)
            + b2_ref[...])
    h = act(jnp.dot(h, w3_ref[...], preferred_element_type=jnp.float32)
            + b3_ref[...])

    # Layer 4: lane-dense (zero-padded to 128 lanes) output.
    out = jnp.dot(h, w4_ref[...], preferred_element_type=jnp.float32) + b4_ref[...]
    o_ref[...] = out.astype(o_ref.dtype)              # (TM, 128)


def init_params(key):
    """Deterministic PyTorch-style Linear init: U(-1/sqrt(fan_in), +1/sqrt(fan_in))."""
    dims = [(IN_F, HIDDEN), (HIDDEN, HIDDEN), (HIDDEN, HIDDEN), (HIDDEN, OUT_F)]
    params = []
    for (fi, fo) in dims:
        key, kw, kb = jax.random.split(key, 3)
        bound = 1.0 / (fi ** 0.5)
        w = jax.random.uniform(kw, (fi, fo), jnp.float32, -bound, bound)
        b = jax.random.uniform(kb, (1, fo), jnp.float32, -bound, bound)
        params.extend([w, b])
    return params


def prepare_params(params):
    """One-time weight prep, hoisted out of the per-call forward path."""
    w1, b1, w2, b2, w3, b3, w4, b4 = params
    w2b = w2.astype(jnp.bfloat16)
    w3b = w3.astype(jnp.bfloat16)
    w4p = jnp.zeros((HIDDEN, OUT_PAD), jnp.bfloat16).at[:, :OUT_F].set(
        w4.astype(jnp.bfloat16))
    b4p = jnp.zeros((1, OUT_PAD), jnp.float32).at[:, :OUT_F].set(
        b4.astype(jnp.float32))
    return (w1.astype(jnp.float32), b1.astype(jnp.float32),
            w2b, b2.astype(jnp.float32),
            w3b, b3.astype(jnp.float32),
            w4p, b4p)


@functools.partial(jax.jit, static_argnames=("tm_max",))
def generator_forward(z, prepped, tm_max=512):
    w1, b1, w2b, b2, w3b, b3, w4p, b4p = prepped
    B = z.shape[0]

    tm = _choose_tm(B, tm_max=tm_max)       # static at trace time
    Bp = _round_up(B, tm)
    zp = jnp.pad(z, ((0, Bp - B), (0, 0))) if Bp != B else z

    grid = (Bp // tm,)
    const = lambda i: (0, 0)                # weights/biases: VMEM-resident
    in_specs = [
        pl.BlockSpec((tm, IN_F), lambda i: (i, 0)),        # z tile
        pl.BlockSpec((IN_F, HIDDEN), const),               # w1
        pl.BlockSpec((1, HIDDEN), const),                  # b1
        pl.BlockSpec((HIDDEN, HIDDEN), const),             # w2 (bf16)
        pl.BlockSpec((1, HIDDEN), const),                  # b2
        pl.BlockSpec((HIDDEN, HIDDEN), const),             # w3 (bf16)
        pl.BlockSpec((1, HIDDEN), const),                  # b3
        pl.BlockSpec((HIDDEN, OUT_PAD), const),            # w4 padded (bf16)
        pl.BlockSpec((1, OUT_PAD), const),                 # b4 padded
    ]
    out_spec = pl.BlockSpec((tm, OUT_PAD), lambda i: (i, 0))

    bytes_accessed = int(
        Bp * IN_F * 4 + Bp * OUT_PAD * 4            # z in, padded out
        + IN_F * HIDDEN * 4 + 2 * HIDDEN * HIDDEN * 2 + HIDDEN * OUT_PAD * 2
        + 3 * HIDDEN * 4 + OUT_PAD * 4)             # weights + biases
    cost = pl.CostEstimate(
        flops=int(2 * Bp * (IN_F * HIDDEN + 2 * HIDDEN * HIDDEN + HIDDEN * OUT_PAD)),
        transcendentals=int(3 * Bp * HIDDEN),
        bytes_accessed=bytes_accessed)

    kernel = functools.partial(generator_kernel, bf16_tanh=_BF16_TANH)

    out = pl.pallas_call(
        kernel,
        out_shape=jax.ShapeDtypeStruct((Bp, OUT_PAD), jnp.float32),
        grid=grid,
        in_specs=in_specs,
        out_specs=out_spec,
        compiler_params=pltpu.CompilerParams(
            dimension_semantics=("parallel",),
            vmem_limit_bytes=32 * 1024 * 1024),
        cost_estimate=cost,
    )(zp, w1, b1, w2b, b2, w3b, b3, w4p, b4p)

    # Drop batch padding and lane padding; data.view(B, -1) is a no-op here.
    return out[:B, :OUT_F].reshape(B, -1)


def generator_reference_f32(z, params):
    """Pure f32 reference (matches the PyTorch module's math)."""
    w1, b1, w2, b2, w3, b3, w4, b4 = params
    h = jnp.tanh(z @ w1 + b1)
    h = jnp.tanh(h @ w2 + b2)
    h = jnp.tanh(h @ w3 + b3)
    return (h @ w4 + b4).reshape(z.shape[0], -1)


def generator_reference_matched(z, params, *, bf16_tanh):
    """Reference using the same bf16/f32 arithmetic as the kernel."""
    w1, b1, w2, b2, w3, b3, w4, b4 = params
    if bf16_tanh:
        act = lambda x: jnp.tanh(x.astype(jnp.bfloat16))
    else:
        act = lambda x: jnp.tanh(x).astype(jnp.bfloat16)
    h = act(z @ w1 + b1)
    h = act(jnp.dot(h, w2.astype(jnp.bfloat16),
                    preferred_element_type=jnp.float32) + b2)
    h = act(jnp.dot(h, w3.astype(jnp.bfloat16),
                    preferred_element_type=jnp.float32) + b3)
    out = jnp.dot(h, w4.astype(jnp.bfloat16),
                  preferred_element_type=jnp.float32) + b4
    return out.reshape(z.shape[0], -1)


if __name__ == "__main__":
    key = jax.random.PRNGKey(0)
    kz, kz2, kz3, kp = jax.random.split(key, 4)
    raw_params = init_params(kp)
    prepped = prepare_params(raw_params)

    # bf16 tanh (v6e/v7x) deviates a bit more from the f32-tanh reference.
    tol_m = 3e-2 if _BF16_TANH else 3e-3

    # Small batch (single tile).
    B = 8
    z = jax.random.normal(kz, (B, IN_F), jnp.float32)
    out = jax.block_until_ready(generator_forward(z, prepped))
    assert out.shape == (B, OUT_F)
    ref_m = generator_reference_matched(z, raw_params, bf16_tanh=_BF16_TANH)
    ref_f = generator_reference_f32(z, raw_params)
    assert jnp.allclose(out, ref_m, atol=tol_m, rtol=tol_m), "mismatch vs matched reference"
    assert jnp.allclose(out, ref_f, atol=1.2e-1, rtol=1.2e-1), "mismatch vs f32 reference"

    # Batch not divisible by the tile (adaptive tm -> 152, 2-step grid).
    B2 = 300
    z2 = jax.random.normal(kz2, (B2, IN_F), jnp.float32)
    out2 = jax.block_until_ready(generator_forward(z2, prepped))
    assert out2.shape == (B2, OUT_F)
    ref2 = generator_reference_matched(z2, raw_params, bf16_tanh=_BF16_TANH)
    assert jnp.allclose(out2, ref2, atol=tol_m, rtol=tol_m), "mismatch vs matched reference (B=300)"

    # Larger batch (two 512-row tiles).
    B3 = 1024
    z3 = jax.random.normal(kz3, (B3, IN_F), jnp.float32)
    out3 = jax.block_until_ready(generator_forward(z3, prepped))
    assert out3.shape == (B3, OUT_F)
    ref3 = generator_reference_matched(z3, raw_params, bf16_tanh=_BF16_TANH)
    assert jnp.allclose(out3, ref3, atol=tol_m, rtol=tol_m), "mismatch vs matched reference (B=1024)"

    print("KERNEL_OK")
</pallas_src>

<mosaic_0001>
module attributes {stable_mosaic.version = 11 : i64} {
  func.func @generator_kernel(%arg0: i32, %arg1: memref<8x2xf32, #tpu.memory_space<vmem>>, %arg2: memref<2x512xf32, #tpu.memory_space<vmem>>, %arg3: memref<1x512xf32, #tpu.memory_space<vmem>>, %arg4: memref<512x512xbf16, #tpu.memory_space<vmem>>, %arg5: memref<1x512xf32, #tpu.memory_space<vmem>>, %arg6: memref<512x512xbf16, #tpu.memory_space<vmem>>, %arg7: memref<1x512xf32, #tpu.memory_space<vmem>>, %arg8: memref<512x128xbf16, #tpu.memory_space<vmem>>, %arg9: memref<1x128xf32, #tpu.memory_space<vmem>>, %arg10: memref<8x128xf32, #tpu.memory_space<vmem>>) attributes {dimension_semantics = [#tpu.dimension_semantics<parallel>], iteration_bounds = array<i64: 1>, scalar_prefetch = 0 : i64, scratch_operands = 0 : i64, tpu.core_type = #tpu.core_type<tc>, window_params = [{transform_indices = @transform_0, window_bounds = array<i64: 8, 2>}, {pipeline_mode = #tpu.pipeline_mode<synchronous>, transform_indices = @transform_1, window_bounds = array<i64: 2, 512>}, {pipeline_mode = #tpu.pipeline_mode<synchronous>, transform_indices = @transform_2, window_bounds = array<i64: 1, 512>}, {pipeline_mode = #tpu.pipeline_mode<synchronous>, transform_indices = @transform_3, window_bounds = array<i64: 512, 512>}, {pipeline_mode = #tpu.pipeline_mode<synchronous>, transform_indices = @transform_4, window_bounds = array<i64: 1, 512>}, {pipeline_mode = #tpu.pipeline_mode<synchronous>, transform_indices = @transform_5, window_bounds = array<i64: 512, 512>}, {pipeline_mode = #tpu.pipeline_mode<synchronous>, transform_indices = @transform_6, window_bounds = array<i64: 1, 512>}, {pipeline_mode = #tpu.pipeline_mode<synchronous>, transform_indices = @transform_7, window_bounds = array<i64: 512, 128>}, {pipeline_mode = #tpu.pipeline_mode<synchronous>, transform_indices = @transform_8, window_bounds = array<i64: 1, 128>}, {transform_indices = @transform_9, window_bounds = array<i64: 8, 128>}]} {
    %c0 = arith.constant 0 : index
    %c0_0 = arith.constant 0 : index
    %0 = vector.load %arg1[%c0, %c0_0] : memref<8x2xf32, #tpu.memory_space<vmem>>, vector<8x2xf32>
    %c0_1 = arith.constant 0 : index
    %c0_2 = arith.constant 0 : index
    %1 = vector.load %arg2[%c0_1, %c0_2] : memref<2x512xf32, #tpu.memory_space<vmem>>, vector<2x512xf32>
    %2 = vector.extract_strided_slice %0 {offsets = [0, 0], sizes = [8, 1], strides = [1, 1]} : vector<8x2xf32> to vector<8x1xf32>
    %3 = vector.extract_strided_slice %1 {offsets = [0, 0], sizes = [1, 512], strides = [1, 1]} : vector<2x512xf32> to vector<1x512xf32>
    %4 = vector.broadcast %2 : vector<8x1xf32> to vector<8x512xf32>
    %5 = vector.broadcast %3 : vector<1x512xf32> to vector<8x512xf32>
    %6 = arith.mulf %4, %5 : vector<8x512xf32>
    %7 = vector.extract_strided_slice %0 {offsets = [0, 1], sizes = [8, 1], strides = [1, 1]} : vector<8x2xf32> to vector<8x1xf32>
    %8 = vector.extract_strided_slice %1 {offsets = [1, 0], sizes = [1, 512], strides = [1, 1]} : vector<2x512xf32> to vector<1x512xf32>
    %9 = vector.broadcast %7 : vector<8x1xf32> to vector<8x512xf32>
    %10 = vector.broadcast %8 : vector<1x512xf32> to vector<8x512xf32>
    %11 = arith.mulf %9, %10 : vector<8x512xf32>
    %12 = arith.addf %6, %11 : vector<8x512xf32>
    %c0_3 = arith.constant 0 : index
    %c0_4 = arith.constant 0 : index
    %13 = vector.load %arg3[%c0_3, %c0_4] : memref<1x512xf32, #tpu.memory_space<vmem>>, vector<1x512xf32>
    %14 = vector.broadcast %13 : vector<1x512xf32> to vector<8x512xf32>
    %15 = arith.addf %12, %14 : vector<8x512xf32>
    %16 = arith.truncf %15 : vector<8x512xf32> to vector<8x512xbf16>
    %17 = math.tanh %16 : vector<8x512xbf16>
    %c0_5 = arith.constant 0 : index
    %c0_6 = arith.constant 0 : index
    %18 = vector.load %arg4[%c0_5, %c0_6] : memref<512x512xbf16, #tpu.memory_space<vmem>>, vector<512x512xbf16>
    %cst = arith.constant dense<0.000000e+00> : vector<8x512xf32>
    %19 = tpu.matmul %17, %18, %cst {dimension_numbers = #tpu.dot_dimension_numbers<[1], [0], [0], [1], [0, 0, 1, 1], [], []>} : vector<8x512xbf16>, vector<512x512xbf16>, vector<8x512xf32> -> vector<8x512xf32>
    %c0_7 = arith.constant 0 : index
    %c0_8 = arith.constant 0 : index
    %20 = vector.load %arg5[%c0_7, %c0_8] : memref<1x512xf32, #tpu.memory_space<vmem>>, vector<1x512xf32>
    %21 = vector.broadcast %20 : vector<1x512xf32> to vector<8x512xf32>
    %22 = arith.addf %19, %21 : vector<8x512xf32>
    %23 = arith.truncf %22 : vector<8x512xf32> to vector<8x512xbf16>
    %24 = math.tanh %23 : vector<8x512xbf16>
    %c0_9 = arith.constant 0 : index
    %c0_10 = arith.constant 0 : index
    %25 = vector.load %arg6[%c0_9, %c0_10] : memref<512x512xbf16, #tpu.memory_space<vmem>>, vector<512x512xbf16>
    %cst_11 = arith.constant dense<0.000000e+00> : vector<8x512xf32>
    %26 = tpu.matmul %24, %25, %cst_11 {dimension_numbers = #tpu.dot_dimension_numbers<[1], [0], [0], [1], [0, 0, 1, 1], [], []>} : vector<8x512xbf16>, vector<512x512xbf16>, vector<8x512xf32> -> vector<8x512xf32>
    %c0_12 = arith.constant 0 : index
    %c0_13 = arith.constant 0 : index
    %27 = vector.load %arg7[%c0_12, %c0_13] : memref<1x512xf32, #tpu.memory_space<vmem>>, vector<1x512xf32>
    %28 = vector.broadcast %27 : vector<1x512xf32> to vector<8x512xf32>
    %29 = arith.addf %26, %28 : vector<8x512xf32>
    %30 = arith.truncf %29 : vector<8x512xf32> to vector<8x512xbf16>
    %31 = math.tanh %30 : vector<8x512xbf16>
    %c0_14 = arith.constant 0 : index
    %c0_15 = arith.constant 0 : index
    %32 = vector.load %arg8[%c0_14, %c0_15] : memref<512x128xbf16, #tpu.memory_space<vmem>>, vector<512x128xbf16>
    %cst_16 = arith.constant dense<0.000000e+00> : vector<8x128xf32>
    %33 = tpu.matmul %31, %32, %cst_16 {dimension_numbers = #tpu.dot_dimension_numbers<[1], [0], [0], [1], [0, 0, 1, 1], [], []>} : vector<8x512xbf16>, vector<512x128xbf16>, vector<8x128xf32> -> vector<8x128xf32>
    %c0_17 = arith.constant 0 : index
    %c0_18 = arith.constant 0 : index
    %34 = vector.load %arg9[%c0_17, %c0_18] : memref<1x128xf32, #tpu.memory_space<vmem>>, vector<1x128xf32>
    %35 = vector.broadcast %34 : vector<1x128xf32> to vector<8x128xf32>
    %36 = arith.addf %33, %35 : vector<8x128xf32>
    %c0_19 = arith.constant 0 : index
    %c0_20 = arith.constant 0 : index
    %37 = vector.load %arg10[%c0_19, %c0_20] : memref<8x128xf32, #tpu.memory_space<vmem>>, vector<8x128xf32>
    tpu.vector_store %arg10[%c0_19, %c0_20], %36 {strides = array<i32>} : memref<8x128xf32, #tpu.memory_space<vmem>>, vector<8x128xf32>,
    return
  }
  func.func @transform_0(%arg0: i32) -> (i32, i32) {
    %c0_i32 = arith.constant 0 : i32
    %c0_i32_0 = arith.constant 0 : i32
    return %arg0, %c0_i32 : i32, i32
  }
  func.func @transform_1(%arg0: i32) -> (i32, i32) {
    %c0_i32 = arith.constant 0 : i32
    %c0_i32_0 = arith.constant 0 : i32
    %c0_i32_1 = arith.constant 0 : i32
    return %c0_i32, %c0_i32_0 : i32, i32
  }
  func.func @transform_2(%arg0: i32) -> (i32, i32) {
    %c0_i32 = arith.constant 0 : i32
    %c0_i32_0 = arith.constant 0 : i32
    %c0_i32_1 = arith.constant 0 : i32
    return %c0_i32, %c0_i32_0 : i32, i32
  }
  func.func @transform_3(%arg0: i32) -> (i32, i32) {
    %c0_i32 = arith.constant 0 : i32
    %c0_i32_0 = arith.constant 0 : i32
    %c0_i32_1 = arith.constant 0 : i32
    return %c0_i32, %c0_i32_0 : i32, i32
  }
  func.func @transform_4(%arg0: i32) -> (i32, i32) {
    %c0_i32 = arith.constant 0 : i32
    %c0_i32_0 = arith.constant 0 : i32
    %c0_i32_1 = arith.constant 0 : i32
    return %c0_i32, %c0_i32_0 : i32, i32
  }
  func.func @transform_5(%arg0: i32) -> (i32, i32) {
    %c0_i32 = arith.constant 0 : i32
    %c0_i32_0 = arith.constant 0 : i32
    %c0_i32_1 = arith.constant 0 : i32
    return %c0_i32, %c0_i32_0 : i32, i32
  }
  func.func @transform_6(%arg0: i32) -> (i32, i32) {
    %c0_i32 = arith.constant 0 : i32
    %c0_i32_0 = arith.constant 0 : i32
    %c0_i32_1 = arith.constant 0 : i32
    return %c0_i32, %c0_i32_0 : i32, i32
  }
  func.func @transform_7(%arg0: i32) -> (i32, i32) {
    %c0_i32 = arith.constant 0 : i32
    %c0_i32_0 = arith.constant 0 : i32
    %c0_i32_1 = arith.constant 0 : i32
    return %c0_i32, %c0_i32_0 : i32, i32
  }
  func.func @transform_8(%arg0: i32) -> (i32, i32) {
    %c0_i32 = arith.constant 0 : i32
    %c0_i32_0 = arith.constant 0 : i32
    %c0_i32_1 = arith.constant 0 : i32
    return %c0_i32, %c0_i32_0 : i32, i32
  }
  func.func @transform_9(%arg0: i32) -> (i32, i32) {
    %c0_i32 = arith.constant 0 : i32
    %c0_i32_0 = arith.constant 0 : i32
    return %arg0, %c0_i32 : i32, i32
  }
}

</mosaic_0001>

<llo_original>
// kernel: generator_forward.1
$region0: #{generator_forward.1}
  #allocation0 [shape = 'u32[]', space=smem, size = 0x4, offset = 0x4, fixed_abs, tag = 'smem constant byte address 0x4 - core index']
  #allocation1 [shape = 'u32[144,128]{1,0:T(1,128)}', space=vmem, size = 0x12000, scoped, tag = 'internal scratch']
  %s0 = inlined_call_operand.vmem [shape: f32[8,2], index: 0, kind: input, shape index: {}]
  %s1 = inlined_call_operand.vmem [shape: f32[2,512], index: 1, kind: input, shape index: {}]
  %s2 = inlined_call_operand.vmem [shape: f32[1,512], index: 2, kind: input, shape index: {}]
  %s3 = inlined_call_operand.hbm [shape: bf16[512,512], index: 3, kind: input, shape index: {}]
  %s4 = inlined_call_operand.vmem [shape: f32[1,512], index: 4, kind: input, shape index: {}]
  %s5 = inlined_call_operand.hbm [shape: bf16[512,512], index: 5, kind: input, shape index: {}]
  %s6 = inlined_call_operand.vmem [shape: f32[1,512], index: 6, kind: input, shape index: {}]
  %s7 = inlined_call_operand.hbm [shape: bf16[512,128], index: 7, kind: input, shape index: {}]
  %s8 = inlined_call_operand.vmem [shape: f32[1,128], index: 8, kind: input, shape index: {}]
  %s9 = inlined_call_operand.vmem [shape: f32[8,128], index: 9, kind: output, shape index: {}]
  %s10 = sld [smem:[#allocation0]]
  $region58: #{generator_forward.1} parent=0
    _
  %s12 = ssub.s32 1, %s10
  %s13 = scalar_select 0, %s12, %s10
  $region1: #{generator_forward.1} parent=0
    #allocation2 [shape = 'u8[524288]{0}', space=vmem, size = 0x80000, scoped, tag = 'input window, operand 3, single buffered']
    #allocation3 [shape = 's32[1]{0}', space=sflag, size = 0x4, scoped, tag = 'scoped memory for generator_forward.1']
    #allocation4 [shape = 'u8[524288]{0}', space=vmem, size = 0x80000, scoped, tag = 'input window, operand 5, single buffered']
    #allocation5 [shape = 's32[1]{0}', space=sflag, size = 0x4, scoped, tag = 'scoped memory for generator_forward.1']
    #allocation6 [shape = 'u8[131072]{0}', space=vmem, size = 0x20000, scoped, tag = 'input window, operand 7, single buffered']
    %14 = vsyncpa [#allocation3], 0
    %15 = vsyncpa [#allocation5], 0
    // Predicated region
    $region2: #{generator_forward.1} parent=1 // pred_check
      _
    $region3: #{generator_forward.1} parent=1 // pred_check_branch
      %17 = sbr.rel (0) target = $region5
    $region4: #{generator_forward.1} parent=1 // pred_region
      _
    $region5: #{generator_forward.1} parent=1 // pred_fallthru
      _
    // Predicated region
    $region6: #{generator_forward.1} parent=1 // pred_check
      _
    $region7: #{generator_forward.1} parent=1 // pred_check_branch
      %19 = sbr.rel (0) target = $region9
    $region8: #{generator_forward.1} parent=1 // pred_region
      _
    $region9: #{generator_forward.1} parent=1 // pred_fallthru
      _
    // Predicated region
    $region10: #{generator_forward.1} parent=1 // pred_check
      _
    $region11: #{generator_forward.1} parent=1 // pred_check_branch
      %21 = sbr.rel (0) target = $region13
    $region12: #{generator_forward.1} parent=1 // pred_region
      _
    $region13: #{generator_forward.1} parent=1 // pred_fallthru
      _
    // Predicated region
    $region14: #{generator_forward.1} parent=1 // pred_check
      _
    $region15: #{generator_forward.1} parent=1 // pred_check_branch
      %23 = sbr.rel (0) target = $region17
    $region16: #{generator_forward.1} parent=1 // pred_region
      %s25 = ssub.s32 16384, 16384
      %26 = vsyncadd [#allocation3], %s25
      %s27 = sshll.u32 [#allocation2], 4
      %s28 = int_to_ptr.vmem [resolvable:$true] %s27
      %33 = dma.hbm_to_vmem [thread:$0]  %s3, 16384, %s28, [#allocation3], 256, 256, 16
    $region17: #{generator_forward.1} parent=1 // pred_fallthru
      _
    // Predicated region
    $region18: #{generator_forward.1} parent=1 // pred_check
      _
    $region19: #{generator_forward.1} parent=1 // pred_check_branch
      %35 = sbr.rel (0) target = $region21
    $region20: #{generator_forward.1} parent=1 // pred_region
      _
    $region21: #{generator_forward.1} parent=1 // pred_fallthru
      _
    // Predicated region
    $region22: #{generator_forward.1} parent=1 // pred_check
      _
    $region23: #{generator_forward.1} parent=1 // pred_check_branch
      %37 = sbr.rel (0) target = $region25
    $region24: #{generator_forward.1} parent=1 // pred_region
      %s39 = ssub.s32 16384, 16384
      %40 = vsyncadd [#allocation5], %s39
      %s41 = sshll.u32 [#allocation4], 4
      %s42 = int_to_ptr.vmem [resolvable:$true] %s41
      %47 = dma.hbm_to_vmem [thread:$0]  %s5, 16384, %s42, [#allocation5], 256, 256, 16
    $region25: #{generator_forward.1} parent=1 // pred_fallthru
      _
    // Predicated region
    $region26: #{generator_forward.1} parent=1 // pred_check
      _
    $region27: #{generator_forward.1} parent=1 // pred_check_branch
      %49 = sbr.rel (0) target = $region29
    $region28: #{generator_forward.1} parent=1 // pred_region
      _
    $region29: #{generator_forward.1} parent=1 // pred_fallthru
      _
    // Predicated region
    $region30: #{generator_forward.1} parent=1 // pred_check
      _
    $region31: #{generator_forward.1} parent=1 // pred_check_branch
      %51 = sbr.rel (0) target = $region33
    $region32: #{generator_forward.1} parent=1 // pred_region
      %s53 = ssub.s32 4096, 4096
      %54 = vsyncadd [#allocation5], %s53
      %s55 = sshll.u32 [#allocation6], 4
      %s56 = int_to_ptr.vmem [resolvable:$true] %s55
      %61 = dma.hbm_to_vmem [thread:$0]  %s7, 4096, %s56, [#allocation5], 64, 64, 4
    $region33: #{generator_forward.1} parent=1 // pred_fallthru
      _
    // Predicated region
    $region34: #{generator_forward.1} parent=1 // pred_check
      _
    $region35: #{generator_forward.1} parent=1 // pred_check_branch
      %63 = sbr.rel (0) target = $region37
    $region36: #{generator_forward.1} parent=1 // pred_region
      _
    $region37: #{generator_forward.1} parent=1 // pred_fallthru
      _
    // Predicated region
    $region38: #{generator_forward.1} parent=1 // pred_check
      _
    $region39: #{generator_forward.1} parent=1 // pred_check_branch
      %65 = sbr.rel (0) target = $region41
    $region40: #{generator_forward.1} parent=1 // pred_region
      %66 = dma.done [#allocation3], 16384
    $region41: #{generator_forward.1} parent=1 // pred_fallthru
      _
    // Predicated region
    $region42: #{generator_forward.1} parent=1 // pred_check
      _
    $region43: #{generator_forward.1} parent=1 // pred_check_branch
      %68 = sbr.rel (0) target = $region45
    $region44: #{generator_forward.1} parent=1 // pred_region
      %69 = dma.done [#allocation5], 16384
    $region45: #{generator_forward.1} parent=1 // pred_fallthru
      _
    // Predicated region
    $region46: #{generator_forward.1} parent=1 // pred_check
      _
    $region47: #{generator_forward.1} parent=1 // pred_check_branch
      %71 = sbr.rel (0) target = $region49
    $region48: #{generator_forward.1} parent=1 // pred_region
      %72 = dma.done [#allocation5], 4096
    $region49: #{generator_forward.1} parent=1 // pred_fallthru
      _
    %v74 = vld [vmem:[%s0] sm:$0xff]
    %v75 = vld [vmem:[%s1] sm:$0xff]
    %77 = vset.pattern.permute.xlu0 0
    %78 = vperm.xlu0 %77, %v74
    %v79 = vpop.permute.xlu0 %78
    %v82 = vlaneseq
    %v83 = vshrl.u32 %v82, 7
    %v84 = vsub.s32 0, %v83
    %v85 = vrot.slane %v75, %v84
    %v86 = vlaneseq
    %v87 = vshrl.u32 %v86, 7
    %v88 = vsub.s32 2, %v87
    %v89 = vrot.slane %v75, %v88
    %v90 = vlaneseq
    %v91 = vshrl.u32 %v90, 7
    %v92 = vsub.s32 4, %v91
    %v93 = vrot.slane %v75, %v92
    %v94 = vlaneseq
    %v95 = vshrl.u32 %v94, 7
    %v96 = vsub.s32 6, %v95
    %v97 = vrot.slane %v75, %v96
    %v102 = vlaneseq
    %v103 = vshrl.u32 %v102, 7
    %v104 = vsub.s32 0, %v103
    %v105 = vrot.slane %v85, %v104
    %v106 = vlaneseq
    %v107 = vshrl.u32 %v106, 7
    %v108 = vsub.s32 0, %v107
    %v109 = vrot.slane %v89, %v108
    %v110 = vlaneseq
    %v111 = vshrl.u32 %v110, 7
    %v112 = vsub.s32 0, %v111
    %v113 = vrot.slane %v93, %v112
    %v114 = vlaneseq
    %v115 = vshrl.u32 %v114, 7
    %v116 = vsub.s32 0, %v115
    %v117 = vrot.slane %v97, %v116
    %v118 = vmul.f32 %v79, %v105
    %v119 = vmul.f32 %v79, %v109
    %v120 = vmul.f32 %v79, %v113
    %v121 = vmul.f32 %v79, %v117
    %122 = vset.pattern.permute.xlu0 1
    %123 = vperm.xlu0 %122, %v74
    %v124 = vpop.permute.xlu0 %123
    %v126 = vlaneseq
    %v127 = vshrl.u32 %v126, 7
    %v128 = vsub.s32 1, %v127
    %v129 = vrot.slane %v75, %v128
    %v130 = vlaneseq
    %v131 = vshrl.u32 %v130, 7
    %v132 = vsub.s32 3, %v131
    %v133 = vrot.slane %v75, %v132
    %v134 = vlaneseq
    %v135 = vshrl.u32 %v134, 7
    %v136 = vsub.s32 5, %v135
    %v137 = vrot.slane %v75, %v136
    %v138 = vlaneseq
    %v139 = vshrl.u32 %v138, 7
    %v140 = vsub.s32 7, %v139
    %v141 = vrot.slane %v75, %v140
    %v146 = vlaneseq
    %v147 = vshrl.u32 %v146, 7
    %v148 = vsub.s32 1, %v147
    %v149 = vrot.slane %v129, %v148
    %v150 = vlaneseq
    %v151 = vshrl.u32 %v150, 7
    %v152 = vsub.s32 1, %v151
    %v153 = vrot.slane %v133, %v152
    %v154 = vlaneseq
    %v155 = vshrl.u32 %v154, 7
    %v156 = vsub.s32 1, %v155
    %v157 = vrot.slane %v137, %v156
    %v158 = vlaneseq
    %v159 = vshrl.u32 %v158, 7
    %v160 = vsub.s32 1, %v159
    %v161 = vrot.slane %v141, %v160
    %v162 = vmul.f32 %v124, %v149
    %v163 = vmul.f32 %v124, %v153
    %v164 = vmul.f32 %v124, %v157
    %v165 = vmul.f32 %v124, %v161
    %v166 = vadd.f32 %v118, %v162
    %v167 = vadd.f32 %v119, %v163
    %v168 = vadd.f32 %v120, %v164
    %v169 = vadd.f32 %v121, %v165
    %v170 = vld [vmem:[%s2] sm:$0xf]
    %v172 = vlaneseq
    %v173 = vshrl.u32 %v172, 7
    %v174 = vsub.s32 0, %v173
    %v175 = vrot.slane %v170, %v174
    %v176 = vlaneseq
    %v177 = vshrl.u32 %v176, 7
    %v178 = vsub.s32 1, %v177
    %v179 = vrot.slane %v170, %v178
    %v180 = vlaneseq
    %v181 = vshrl.u32 %v180, 7
    %v182 = vsub.s32 2, %v181
    %v183 = vrot.slane %v170, %v182
    %v184 = vlaneseq
    %v185 = vshrl.u32 %v184, 7
    %v186 = vsub.s32 3, %v185
    %v187 = vrot.slane %v170, %v186
    %v192 = vadd.f32 %v166, %v175
    %v193 = vadd.f32 %v167, %v179
    %v194 = vadd.f32 %v168, %v183
    %v195 = vadd.f32 %v169, %v187
    %v196 = vpack.c.bf16 %v192, %v192
    %v197 = vpack.c.bf16 %v193, %v193
    %v198 = vpack.c.bf16 %v194, %v194
    %v199 = vpack.c.bf16 %v195, %v195
    %v200 = vtanh.bf16.pop %v196
    %v201 = vtanh.bf16.pop %v197
    %v202 = vtanh.bf16.pop %v198
    %v203 = vtanh.bf16.pop %v199
    %v204 = vld [vmem:[#allocation2] sm:$0xff]
    %v205 = vld [vmem:[#allocation2 + $0x8] sm:$0xff]
    %v206 = vld [vmem:[#allocation2 + $0x10] sm:$0xff]
    %v207 = vld [vmem:[#allocation2 + $0x18] sm:$0xff]
    %v208 = vld [vmem:[#allocation2 + $0x20] sm:$0xff]
    %v209 = vld [vmem:[#allocation2 + $0x28] sm:$0xff]
    %v210 = vld [vmem:[#allocation2 + $0x30] sm:$0xff]
    %v211 = vld [vmem:[#allocation2 + $0x38] sm:$0xff]
    %v212 = vld [vmem:[#allocation2 + $0x40] sm:$0xff]
    %v213 = vld [vmem:[#allocation2 + $0x48] sm:$0xff]
    %v214 = vld [vmem:[#allocation2 + $0x50] sm:$0xff]
    %v215 = vld [vmem:[#allocation2 + $0x58] sm:$0xff]
    %v216 = vld [vmem:[#allocation2 + $0x60] sm:$0xff]
    %v217 = vld [vmem:[#allocation2 + $0x68] sm:$0xff]
    %v218 = vld [vmem:[#allocation2 + $0x70] sm:$0xff]
    %v219 = vld [vmem:[#allocation2 + $0x78] sm:$0xff]
    %v220 = vld [vmem:[#allocation2 + $0x80] sm:$0xff]
    %v221 = vld [vmem:[#allocation2 + $0x88] sm:$0xff]
    %v222 = vld [vmem:[#allocation2 + $0x90] sm:$0xff]
    %v223 = vld [vmem:[#allocation2 + $0x98] sm:$0xff]
    %v224 = vld [vmem:[#allocation2 + $0xa0] sm:$0xff]
    %v225 = vld [vmem:[#allocation2 + $0xa8] sm:$0xff]
    %v226 = vld [vmem:[#allocation2 + $0xb0] sm:$0xff]
    %v227 = vld [vmem:[#allocation2 + $0xb8] sm:$0xff]
    %v228 = vld [vmem:[#allocation2 + $0xc0] sm:$0xff]
    %v229 = vld [vmem:[#allocation2 + $0xc8] sm:$0xff]
    %v230 = vld [vmem:[#allocation2 + $0xd0] sm:$0xff]
    %v231 = vld [vmem:[#allocation2 + $0xd8] sm:$0xff]
    %v232 = vld [vmem:[#allocation2 + $0xe0] sm:$0xff]
    %v233 = vld [vmem:[#allocation2 + $0xe8] sm:$0xff]
    %v234 = vld [vmem:[#allocation2 + $0xf0] sm:$0xff]
    %v235 = vld [vmem:[#allocation2 + $0xf8] sm:$0xff]
    %v236 = vld [vmem:[#allocation2 + $0x100] sm:$0xff]
    %v237 = vld [vmem:[#allocation2 + $0x108] sm:$0xff]
    %v238 = vld [vmem:[#allocation2 + $0x110] sm:$0xff]
    %v239 = vld [vmem:[#allocation2 + $0x118] sm:$0xff]
    %v240 = vld [vmem:[#allocation2 + $0x120] sm:$0xff]
    %v241 = vld [vmem:[#allocation2 + $0x128] sm:$0xff]
    %v242 = vld [vmem:[#allocation2 + $0x130] sm:$0xff]
    %v243 = vld [vmem:[#allocation2 + $0x138] sm:$0xff]
    %v244 = vld [vmem:[#allocation2 + $0x140] sm:$0xff]
    %v245 = vld [vmem:[#allocation2 + $0x148] sm:$0xff]
    %v246 = vld [vmem:[#allocation2 + $0x150] sm:$0xff]
    %v247 = vld [vmem:[#allocation2 + $0x158] sm:$0xff]
    %v248 = vld [vmem:[#allocation2 + $0x160] sm:$0xff]
    %v249 = vld [vmem:[#allocation2 + $0x168] sm:$0xff]
    %v250 = vld [vmem:[#allocation2 + $0x170] sm:$0xff]
    %v251 = vld [vmem:[#allocation2 + $0x178] sm:$0xff]
    %v252 = vld [vmem:[#allocation2 + $0x180] sm:$0xff]
    %v253 = vld [vmem:[#allocation2 + $0x188] sm:$0xff]
    %v254 = vld [vmem:[#allocation2 + $0x190] sm:$0xff]
    %v255 = vld [vmem:[#allocation2 + $0x198] sm:$0xff]
    %v256 = vld [vmem:[#allocation2 + $0x1a0] sm:$0xff]
    %v257 = vld [vmem:[#allocation2 + $0x1a8] sm:$0xff]
    %v258 = vld [vmem:[#allocation2 + $0x1b0] sm:$0xff]
    %v259 = vld [vmem:[#allocation2 + $0x1b8] sm:$0xff]
    %v260 = vld [vmem:[#allocation2 + $0x1c0] sm:$0xff]
    %v261 = vld [vmem:[#allocation2 + $0x1c8] sm:$0xff]
    %v262 = vld [vmem:[#allocation2 + $0x1d0] sm:$0xff]
    %v263 = vld [vmem:[#allocation2 + $0x1d8] sm:$0xff]
    %v264 = vld [vmem:[#allocation2 + $0x1e0] sm:$0xff]
    %v265 = vld [vmem:[#allocation2 + $0x1e8] sm:$0xff]
    %v266 = vld [vmem:[#allocation2 + $0x1f0] sm:$0xff]
    %v267 = vld [vmem:[#allocation2 + $0x1f8] sm:$0xff]
    %v268 = vld [vmem:[#allocation2 + $0x200] sm:$0xff]
    %v269 = vld [vmem:[#allocation2 + $0x208] sm:$0xff]
    %v270 = vld [vmem:[#allocation2 + $0x210] sm:$0xff]
    %v271 = vld [vmem:[#allocation2 + $0x218] sm:$0xff]
    %v272 = vld [vmem:[#allocation2 + $0x220] sm:$0xff]
    %v273 = vld [vmem:[#allocation2 + $0x228] sm:$0xff]
    %v274 = vld [vmem:[#allocation2 + $0x230] sm:$0xff]
    %v275 = vld [vmem:[#allocation2 + $0x238] sm:$0xff]
    %v276 = vld [vmem:[#allocation2 + $0x240] sm:$0xff]
    %v277 = vld [vmem:[#allocation2 + $0x248] sm:$0xff]
    %v278 = vld [vmem:[#allocation2 + $0x250] sm:$0xff]
    %v279 = vld [vmem:[#allocation2 + $0x258] sm:$0xff]
    %v280 = vld [vmem:[#allocation2 + $0x260] sm:$0xff]
    %v281 = vld [vmem:[#allocation2 + $0x268] sm:$0xff]
    %v282 = vld [vmem:[#allocation2 + $0x270] sm:$0xff]
    %v283 = vld [vmem:[#allocation2 + $0x278] sm:$0xff]
    %v284 = vld [vmem:[#allocation2 + $0x280] sm:$0xff]
    %v285 = vld [vmem:[#allocation2 + $0x288] sm:$0xff]
    %v286 = vld [vmem:[#allocation2 + $0x290] sm:$0xff]
    %v287 = vld [vmem:[#allocation2 + $0x298] sm:$0xff]
    %v288 = vld [vmem:[#allocation2 + $0x2a0] sm:$0xff]
    %v289 = vld [vmem:[#allocation2 + $0x2a8] sm:$0xff]
    %v290 = vld [vmem:[#allocation2 + $0x2b0] sm:$0xff]
    %v291 = vld [vmem:[#allocation2 + $0x2b8] sm:$0xff]
    %v292 = vld [vmem:[#allocation2 + $0x2c0] sm:$0xff]
    %v293 = vld [vmem:[#allocation2 + $0x2c8] sm:$0xff]
    %v294 = vld [vmem:[#allocation2 + $0x2d0] sm:$0xff]
    %v295 = vld [vmem:[#allocation2 + $0x2d8] sm:$0xff]
    %v296 = vld [vmem:[#allocation2 + $0x2e0] sm:$0xff]
    %v297 = vld [vmem:[#allocation2 + $0x2e8] sm:$0xff]
    %v298 = vld [vmem:[#allocation2 + $0x2f0] sm:$0xff]
    %v299 = vld [vmem:[#allocation2 + $0x2f8] sm:$0xff]
    %v300 = vld [vmem:[#allocation2 + $0x300] sm:$0xff]
    %v301 = vld [vmem:[#allocation2 + $0x308] sm:$0xff]
    %v302 = vld [vmem:[#allocation2 + $0x310] sm:$0xff]
    %v303 = vld [vmem:[#allocation2 + $0x318] sm:$0xff]
    %v304 = vld [vmem:[#allocation2 + $0x320] sm:$0xff]
    %v305 = vld [vmem:[#allocation2 + $0x328] sm:$0xff]
    %v306 = vld [vmem:[#allocation2 + $0x330] sm:$0xff]
    %v307 = vld [vmem:[#allocation2 + $0x338] sm:$0xff]
    %v308 = vld [vmem:[#allocation2 + $0x340] sm:$0xff]
    %v309 = vld [vmem:[#allocation2 + $0x348] sm:$0xff]
    %v310 = vld [vmem:[#allocation2 + $0x350] sm:$0xff]
    %v311 = vld [vmem:[#allocation2 + $0x358] sm:$0xff]
    %v312 = vld [vmem:[#allocation2 + $0x360] sm:$0xff]
    %v313 = vld [vmem:[#allocation2 + $0x368] sm:$0xff]
    %v314 = vld [vmem:[#allocation2 + $0x370] sm:$0xff]
    %v315 = vld [vmem:[#allocation2 + $0x378] sm:$0xff]
    %v316 = vld [vmem:[#allocation2 + $0x380] sm:$0xff]
    %v317 = vld [vmem:[#allocation2 + $0x388] sm:$0xff]
    %v318 = vld [vmem:[#allocation2 + $0x390] sm:$0xff]
    %v319 = vld [vmem:[#allocation2 + $0x398] sm:$0xff]
    %v320 = vld [vmem:[#allocation2 + $0x3a0] sm:$0xff]
    %v321 = vld [vmem:[#allocation2 + $0x3a8] sm:$0xff]
    %v322 = vld [vmem:[#allocation2 + $0x3b0] sm:$0xff]
    %v323 = vld [vmem:[#allocation2 + $0x3b8] sm:$0xff]
    %v324 = vld [vmem:[#allocation2 + $0x3c0] sm:$0xff]
    %v325 = vld [vmem:[#allocation2 + $0x3c8] sm:$0xff]
    %v326 = vld [vmem:[#allocation2 + $0x3d0] sm:$0xff]
    %v327 = vld [vmem:[#allocation2 + $0x3d8] sm:$0xff]
    %v328 = vld [vmem:[#allocation2 + $0x3e0] sm:$0xff]
    %v329 = vld [vmem:[#allocation2 + $0x3e8] sm:$0xff]
    %v330 = vld [vmem:[#allocation2 + $0x3f0] sm:$0xff]
    %v331 = vld [vmem:[#allocation2 + $0x3f8] sm:$0xff]
    %v332 = vld [vmem:[%s4] sm:$0xf]
    %v334 = vlaneseq
    %v335 = vshrl.u32 %v334, 7
    %v336 = vsub.s32 0, %v335
    %v337 = vrot.slane %v332, %v336
    %v338 = vlaneseq
    %v339 = vshrl.u32 %v338, 7
    %v340 = vsub.s32 1, %v339
    %v341 = vrot.slane %v332, %v340
    %v342 = vlaneseq
    %v343 = vshrl.u32 %v342, 7
    %v344 = vsub.s32 2, %v343
    %v345 = vrot.slane %v332, %v344
    %v346 = vlaneseq
    %v347 = vshrl.u32 %v346, 7
    %v348 = vsub.s32 3, %v347
    %v349 = vrot.slane %v332, %v348
    %v482 = vunpack.c.l.b16 %v204
    %v483 = vunpack.c.h.b16 %v204
    %v484 = vunpack.c.l.b16 %v205
    %v485 = vunpack.c.h.b16 %v205
    %v486 = vunpack.c.l.b16 %v206
    %v487 = vunpack.c.h.b16 %v206
    %v488 = vunpack.c.l.b16 %v207
    %v489 = vunpack.c.h.b16 %v207
    %v490 = vunpack.c.l.b16 %v208
    %v491 = vunpack.c.h.b16 %v208
    %v492 = vunpack.c.l.b16 %v209
    %v493 = vunpack.c.h.b16 %v209
    %v494 = vunpack.c.l.b16 %v210
    %v495 = vunpack.c.h.b16 %v210
    %v496 = vunpack.c.l.b16 %v211
    %v497 = vunpack.c.h.b16 %v211
    %v498 = vunpack.c.l.b16 %v212
    %v499 = vunpack.c.h.b16 %v212
    %v500 = vunpack.c.l.b16 %v213
    %v501 = vunpack.c.h.b16 %v213
    %v502 = vunpack.c.l.b16 %v214
    %v503 = vunpack.c.h.b16 %v214
    %v504 = vunpack.c.l.b16 %v215
    %v505 = vunpack.c.h.b16 %v215
    %v506 = vunpack.c.l.b16 %v216
    %v507 = vunpack.c.h.b16 %v216
    %v508 = vunpack.c.l.b16 %v217
    %v509 = vunpack.c.h.b16 %v217
    %v510 = vunpack.c.l.b16 %v218
    %v511 = vunpack.c.h.b16 %v218
    %v512 = vunpack.c.l.b16 %v219
    %v513 = vunpack.c.h.b16 %v219
    %v514 = vunpack.c.l.b16 %v220
    %v515 = vunpack.c.h.b16 %v220
    %v516 = vunpack.c.l.b16 %v221
    %v517 = vunpack.c.h.b16 %v221
    %v518 = vunpack.c.l.b16 %v222
    %v519 = vunpack.c.h.b16 %v222
    %v520 = vunpack.c.l.b16 %v223
    %v521 = vunpack.c.h.b16 %v223
    %v522 = vunpack.c.l.b16 %v224
    %v523 = vunpack.c.h.b16 %v224
    %v524 = vunpack.c.l.b16 %v225
    %v525 = vunpack.c.h.b16 %v225
    %v526 = vunpack.c.l.b16 %v226
    %v527 = vunpack.c.h.b16 %v226
    %v528 = vunpack.c.l.b16 %v227
    %v529 = vunpack.c.h.b16 %v227
    %v530 = vunpack.c.l.b16 %v228
    %v531 = vunpack.c.h.b16 %v228
    %v532 = vunpack.c.l.b16 %v229
    %v533 = vunpack.c.h.b16 %v229
    %v534 = vunpack.c.l.b16 %v230
    %v535 = vunpack.c.h.b16 %v230
    %v536 = vunpack.c.l.b16 %v231
    %v537 = vunpack.c.h.b16 %v231
    %v538 = vunpack.c.l.b16 %v232
    %v539 = vunpack.c.h.b16 %v232
    %v540 = vunpack.c.l.b16 %v233
    %v541 = vunpack.c.h.b16 %v233
    %v542 = vunpack.c.l.b16 %v234
    %v543 = vunpack.c.h.b16 %v234
    %v544 = vunpack.c.l.b16 %v235
    %v545 = vunpack.c.h.b16 %v235
    %v546 = vunpack.c.l.b16 %v236
    %v547 = vunpack.c.h.b16 %v236
    %v548 = vunpack.c.l.b16 %v237
    %v549 = vunpack.c.h.b16 %v237
    %v550 = vunpack.c.l.b16 %v238
    %v551 = vunpack.c.h.b16 %v238
    %v552 = vunpack.c.l.b16 %v239
    %v553 = vunpack.c.h.b16 %v239
    %v554 = vunpack.c.l.b16 %v240
    %v555 = vunpack.c.h.b16 %v240
    %v556 = vunpack.c.l.b16 %v241
    %v557 = vunpack.c.h.b16 %v241
    %v558 = vunpack.c.l.b16 %v242
    %v559 = vunpack.c.h.b16 %v242
    %v560 = vunpack.c.l.b16 %v243
    %v561 = vunpack.c.h.b16 %v243
    %v562 = vunpack.c.l.b16 %v244
    %v563 = vunpack.c.h.b16 %v244
    %v564 = vunpack.c.l.b16 %v245
    %v565 = vunpack.c.h.b16 %v245
    %v566 = vunpack.c.l.b16 %v246
    %v567 = vunpack.c.h.b16 %v246
    %v568 = vunpack.c.l.b16 %v247
    %v569 = vunpack.c.h.b16 %v247
    %v570 = vunpack.c.l.b16 %v248
    %v571 = vunpack.c.h.b16 %v248
    %v572 = vunpack.c.l.b16 %v249
    %v573 = vunpack.c.h.b16 %v249
    %v574 = vunpack.c.l.b16 %v250
    %v575 = vunpack.c.h.b16 %v250
    %v576 = vunpack.c.l.b16 %v251
    %v577 = vunpack.c.h.b16 %v251
    %v578 = vunpack.c.l.b16 %v252
    %v579 = vunpack.c.h.b16 %v252
    %v580 = vunpack.c.l.b16 %v253
    %v581 = vunpack.c.h.b16 %v253
    %v582 = vunpack.c.l.b16 %v254
    %v583 = vunpack.c.h.b16 %v254
    %v584 = vunpack.c.l.b16 %v255
    %v585 = vunpack.c.h.b16 %v255
    %v586 = vunpack.c.l.b16 %v256
    %v587 = vunpack.c.h.b16 %v256
    %v588 = vunpack.c.l.b16 %v257
    %v589 = vunpack.c.h.b16 %v257
    %v590 = vunpack.c.l.b16 %v258
    %v591 = vunpack.c.h.b16 %v258
    %v592 = vunpack.c.l.b16 %v259
    %v593 = vunpack.c.h.b16 %v259
    %v594 = vunpack.c.l.b16 %v260
    %v595 = vunpack.c.h.b16 %v260
    %v596 = vunpack.c.l.b16 %v261
    %v597 = vunpack.c.h.b16 %v261
    %v598 = vunpack.c.l.b16 %v262
    %v599 = vunpack.c.h.b16 %v262
    %v600 = vunpack.c.l.b16 %v263
    %v601 = vunpack.c.h.b16 %v263
    %v602 = vunpack.c.l.b16 %v264
    %v603 = vunpack.c.h.b16 %v264
    %v604 = vunpack.c.l.b16 %v265
    %v605 = vunpack.c.h.b16 %v265
    %v606 = vunpack.c.l.b16 %v266
    %v607 = vunpack.c.h.b16 %v266
    %v608 = vunpack.c.l.b16 %v267
    %v609 = vunpack.c.h.b16 %v267
    %v610 = vunpack.c.l.b16 %v268
    %v611 = vunpack.c.h.b16 %v268
    %v612 = vunpack.c.l.b16 %v269
    %v613 = vunpack.c.h.b16 %v269
    %v614 = vunpack.c.l.b16 %v270
    %v615 = vunpack.c.h.b16 %v270
    %v616 = vunpack.c.l.b16 %v271
    %v617 = vunpack.c.h.b16 %v271
    %v618 = vunpack.c.l.b16 %v272
    %v619 = vunpack.c.h.b16 %v272
    %v620 = vunpack.c.l.b16 %v273
    %v621 = vunpack.c.h.b16 %v273
    %v622 = vunpack.c.l.b16 %v274
    %v623 = vunpack.c.h.b16 %v274
    %v624 = vunpack.c.l.b16 %v275
    %v625 = vunpack.c.h.b16 %v275
    %v626 = vunpack.c.l.b16 %v276
    %v627 = vunpack.c.h.b16 %v276
    %v628 = vunpack.c.l.b16 %v277
    %v629 = vunpack.c.h.b16 %v277
    %v630 = vunpack.c.l.b16 %v278
    %v631 = vunpack.c.h.b16 %v278
    %v632 = vunpack.c.l.b16 %v279
    %v633 = vunpack.c.h.b16 %v279
    %v634 = vunpack.c.l.b16 %v280
    %v635 = vunpack.c.h.b16 %v280
    %v636 = vunpack.c.l.b16 %v281
    %v637 = vunpack.c.h.b16 %v281
    %v638 = vunpack.c.l.b16 %v282
    %v639 = vunpack.c.h.b16 %v282
    %v640 = vunpack.c.l.b16 %v283
    %v641 = vunpack.c.h.b16 %v283
    %v642 = vunpack.c.l.b16 %v284
    %v643 = vunpack.c.h.b16 %v284
    %v644 = vunpack.c.l.b16 %v285
    %v645 = vunpack.c.h.b16 %v285
    %v646 = vunpack.c.l.b16 %v286
    %v647 = vunpack.c.h.b16 %v286
    %v648 = vunpack.c.l.b16 %v287
    %v649 = vunpack.c.h.b16 %v287
    %v650 = vunpack.c.l.b16 %v288
    %v651 = vunpack.c.h.b16 %v288
    %v652 = vunpack.c.l.b16 %v289
    %v653 = vunpack.c.h.b16 %v289
    %v654 = vunpack.c.l.b16 %v290
    %v655 = vunpack.c.h.b16 %v290
    %v656 = vunpack.c.l.b16 %v291
    %v657 = vunpack.c.h.b16 %v291
    %v658 = vunpack.c.l.b16 %v292
    %v659 = vunpack.c.h.b16 %v292
    %v660 = vunpack.c.l.b16 %v293
    %v661 = vunpack.c.h.b16 %v293
    %v662 = vunpack.c.l.b16 %v294
    %v663 = vunpack.c.h.b16 %v294
    %v664 = vunpack.c.l.b16 %v295
    %v665 = vunpack.c.h.b16 %v295
    %v666 = vunpack.c.l.b16 %v296
    %v667 = vunpack.c.h.b16 %v296
    %v668 = vunpack.c.l.b16 %v297
    %v669 = vunpack.c.h.b16 %v297
    %v670 = vunpack.c.l.b16 %v298
    %v671 = vunpack.c.h.b16 %v298
    %v672 = vunpack.c.l.b16 %v299
    %v673 = vunpack.c.h.b16 %v299
    %v674 = vunpack.c.l.b16 %v300
    %v675 = vunpack.c.h.b16 %v300
    %v676 = vunpack.c.l.b16 %v301
    %v677 = vunpack.c.h.b16 %v301
    %v678 = vunpack.c.l.b16 %v302
    %v679 = vunpack.c.h.b16 %v302
    %v680 = vunpack.c.l.b16 %v303
    %v681 = vunpack.c.h.b16 %v303
    %v682 = vunpack.c.l.b16 %v304
    %v683 = vunpack.c.h.b16 %v304
    %v684 = vunpack.c.l.b16 %v305
    %v685 = vunpack.c.h.b16 %v305
    %v686 = vunpack.c.l.b16 %v306
    %v687 = vunpack.c.h.b16 %v306
    %v688 = vunpack.c.l.b16 %v307
    %v689 = vunpack.c.h.b16 %v307
    %v690 = vunpack.c.l.b16 %v308
    %v691 = vunpack.c.h.b16 %v308
    %v692 = vunpack.c.l.b16 %v309
    %v693 = vunpack.c.h.b16 %v309
    %v694 = vunpack.c.l.b16 %v310
    %v695 = vunpack.c.h.b16 %v310
    %v696 = vunpack.c.l.b16 %v311
    %v697 = vunpack.c.h.b16 %v311
    %v698 = vunpack.c.l.b16 %v312
    %v699 = vunpack.c.h.b16 %v312
    %v700 = vunpack.c.l.b16 %v313
    %v701 = vunpack.c.h.b16 %v313
    %v702 = vunpack.c.l.b16 %v314
    %v703 = vunpack.c.h.b16 %v314
    %v704 = vunpack.c.l.b16 %v315
    %v705 = vunpack.c.h.b16 %v315
    %v706 = vunpack.c.l.b16 %v316
    %v707 = vunpack.c.h.b16 %v316
    %v708 = vunpack.c.l.b16 %v317
    %v709 = vunpack.c.h.b16 %v317
    %v710 = vunpack.c.l.b16 %v318
    %v711 = vunpack.c.h.b16 %v318
    %v712 = vunpack.c.l.b16 %v319
    %v713 = vunpack.c.h.b16 %v319
    %v714 = vunpack.c.l.b16 %v320
    %v715 = vunpack.c.h.b16 %v320
    %v716 = vunpack.c.l.b16 %v321
    %v717 = vunpack.c.h.b16 %v321
    %v718 = vunpack.c.l.b16 %v322
    %v719 = vunpack.c.h.b16 %v322
    %v720 = vunpack.c.l.b16 %v323
    %v721 = vunpack.c.h.b16 %v323
    %v722 = vunpack.c.l.b16 %v324
    %v723 = vunpack.c.h.b16 %v324
    %v724 = vunpack.c.l.b16 %v325
    %v725 = vunpack.c.h.b16 %v325
    %v726 = vunpack.c.l.b16 %v326
    %v727 = vunpack.c.h.b16 %v326
    %v728 = vunpack.c.l.b16 %v327
    %v729 = vunpack.c.h.b16 %v327
    %v730 = vunpack.c.l.b16 %v328
    %v731 = vunpack.c.h.b16 %v328
    %v732 = vunpack.c.l.b16 %v329
    %v733 = vunpack.c.h.b16 %v329
    %v734 = vunpack.c.l.b16 %v330
    %v735 = vunpack.c.h.b16 %v330
    %v736 = vunpack.c.l.b16 %v331
    %v737 = vunpack.c.h.b16 %v331
    %v738 = vpack.c.b16 %v486, %v482
    %v739 = vpack.c.b16 %v487, %v483
    %v740 = vpack.c.b16 %v488, %v484
    %v741 = vpack.c.b16 %v489, %v485
    %v742 = vpack.c.b16 %v494, %v490
    %v743 = vpack.c.b16 %v495, %v491
    %v744 = vpack.c.b16 %v496, %v492
    %v745 = vpack.c.b16 %v497, %v493
    %v746 = vpack.c.b16 %v502, %v498
    %v747 = vpack.c.b16 %v503, %v499
    %v748 = vpack.c.b16 %v504, %v500
    %v749 = vpack.c.b16 %v505, %v501
    %v750 = vpack.c.b16 %v510, %v506
    %v751 = vpack.c.b16 %v511, %v507
    %v752 = vpack.c.b16 %v512, %v508
    %v753 = vpack.c.b16 %v513, %v509
    %v754 = vpack.c.b16 %v518, %v514
    %v755 = vpack.c.b16 %v519, %v515
    %v756 = vpack.c.b16 %v520, %v516
    %v757 = vpack.c.b16 %v521, %v517
    %v758 = vpack.c.b16 %v526, %v522
    %v759 = vpack.c.b16 %v527, %v523
    %v760 = vpack.c.b16 %v528, %v524
    %v761 = vpack.c.b16 %v529, %v525
    %v762 = vpack.c.b16 %v534, %v530
    %v763 = vpack.c.b16 %v535, %v531
    %v764 = vpack.c.b16 %v536, %v532
    %v765 = vpack.c.b16 %v537, %v533
    %v766 = vpack.c.b16 %v542, %v538
    %v767 = vpack.c.b16 %v543, %v539
    %v768 = vpack.c.b16 %v544, %v540
    %v769 = vpack.c.b16 %v545, %v541
    %v770 = vpack.c.b16 %v550, %v546
    %v771 = vpack.c.b16 %v551, %v547
    %v772 = vpack.c.b16 %v552, %v548
    %v773 = vpack.c.b16 %v553, %v549
    %v774 = vpack.c.b16 %v558, %v554
    %v775 = vpack.c.b16 %v559, %v555
    %v776 = vpack.c.b16 %v560, %v556
    %v777 = vpack.c.b16 %v561, %v557
    %v778 = vpack.c.b16 %v566, %v562
    %v779 = vpack.c.b16 %v567, %v563
    %v780 = vpack.c.b16 %v568, %v564
    %v781 = vpack.c.b16 %v569, %v565
    %v782 = vpack.c.b16 %v574, %v570
    %v783 = vpack.c.b16 %v575, %v571
    %v784 = vpack.c.b16 %v576, %v572
    %v785 = vpack.c.b16 %v577, %v573
    %v786 = vpack.c.b16 %v582, %v578
    %v787 = vpack.c.b16 %v583, %v579
    %v788 = vpack.c.b16 %v584, %v580
    %v789 = vpack.c.b16 %v585, %v581
    %v790 = vpack.c.b16 %v590, %v586
    %v791 = vpack.c.b16 %v591, %v587
    %v792 = vpack.c.b16 %v592, %v588
    %v793 = vpack.c.b16 %v593, %v589
    %v794 = vpack.c.b16 %v598, %v594
    %v795 = vpack.c.b16 %v599, %v595
    %v796 = vpack.c.b16 %v600, %v596
    %v797 = vpack.c.b16 %v601, %v597
    %v798 = vpack.c.b16 %v606, %v602
    %v799 = vpack.c.b16 %v607, %v603
    %v800 = vpack.c.b16 %v608, %v604
    %v801 = vpack.c.b16 %v609, %v605
    %v802 = vpack.c.b16 %v614, %v610
    %v803 = vpack.c.b16 %v615, %v611
    %v804 = vpack.c.b16 %v616, %v612
    %v805 = vpack.c.b16 %v617, %v613
    %v806 = vpack.c.b16 %v622, %v618
    %v807 = vpack.c.b16 %v623, %v619
    %v808 = vpack.c.b16 %v624, %v620
    %v809 = vpack.c.b16 %v625, %v621
    %v810 = vpack.c.b16 %v630, %v626
    %v811 = vpack.c.b16 %v631, %v627
    %v812 = vpack.c.b16 %v632, %v628
    %v813 = vpack.c.b16 %v633, %v629
    %v814 = vpack.c.b16 %v638, %v634
    %v815 = vpack.c.b16 %v639, %v635
    %v816 = vpack.c.b16 %v640, %v636
    %v817 = vpack.c.b16 %v641, %v637
    %v818 = vpack.c.b16 %v646, %v642
    %v819 = vpack.c.b16 %v647, %v643
    %v820 = vpack.c.b16 %v648, %v644
    %v821 = vpack.c.b16 %v649, %v645
    %v822 = vpack.c.b16 %v654, %v650
    %v823 = vpack.c.b16 %v655, %v651
    %v824 = vpack.c.b16 %v656, %v652
    %v825 = vpack.c.b16 %v657, %v653
    %v826 = vpack.c.b16 %v662, %v658
    %v827 = vpack.c.b16 %v663, %v659
    %v828 = vpack.c.b16 %v664, %v660
    %v829 = vpack.c.b16 %v665, %v661
    %v830 = vpack.c.b16 %v670, %v666
    %v831 = vpack.c.b16 %v671, %v667
    %v832 = vpack.c.b16 %v672, %v668
    %v833 = vpack.c.b16 %v673, %v669
    %v834 = vpack.c.b16 %v678, %v674
    %v835 = vpack.c.b16 %v679, %v675
    %v836 = vpack.c.b16 %v680, %v676
    %v837 = vpack.c.b16 %v681, %v677
    %v838 = vpack.c.b16 %v686, %v682
    %v839 = vpack.c.b16 %v687, %v683
    %v840 = vpack.c.b16 %v688, %v684
    %v841 = vpack.c.b16 %v689, %v685
    %v842 = vpack.c.b16 %v694, %v690
    %v843 = vpack.c.b16 %v695, %v691
    %v844 = vpack.c.b16 %v696, %v692
    %v845 = vpack.c.b16 %v697, %v693
    %v846 = vpack.c.b16 %v702, %v698
    %v847 = vpack.c.b16 %v703, %v699
    %v848 = vpack.c.b16 %v704, %v700
    %v849 = vpack.c.b16 %v705, %v701
    %v850 = vpack.c.b16 %v710, %v706
    %v851 = vpack.c.b16 %v711, %v707
    %v852 = vpack.c.b16 %v712, %v708
    %v853 = vpack.c.b16 %v713, %v709
    %v854 = vpack.c.b16 %v718, %v714
    %v855 = vpack.c.b16 %v719, %v715
    %v856 = vpack.c.b16 %v720, %v716
    %v857 = vpack.c.b16 %v721, %v717
    %v858 = vpack.c.b16 %v726, %v722
    %v859 = vpack.c.b16 %v727, %v723
    %v860 = vpack.c.b16 %v728, %v724
    %v861 = vpack.c.b16 %v729, %v725
    %v862 = vpack.c.b16 %v734, %v730
    %v863 = vpack.c.b16 %v735, %v731
    %v864 = vpack.c.b16 %v736, %v732
    %v865 = vpack.c.b16 %v737, %v733
    %994 = vmatprep.subr.bf16.mxu0 %v767
    %995 = vmatpush1.bf16.msra.mxu0 %v766
    %996 = vmatprep.subr.bf16.mxu0 %v763
    %997 = vmatpush1.bf16.msra.mxu0 %v762
    %998 = vmatprep.subr.bf16.mxu0 %v759
    %999 = vmatpush1.bf16.msra.mxu0 %v758
    %1000 = vmatprep.subr.bf16.mxu0 %v755
    %1001 = vmatpush1.bf16.msra.mxu0 %v754
    %1002 = vmatprep.subr.bf16.mxu0 %v751
    %1003 = vmatpush1.bf16.msra.mxu0 %v750
    %1004 = vmatprep.subr.bf16.mxu0 %v747
    %1005 = vmatpush1.bf16.msra.mxu0 %v746
    %1006 = vmatprep.subr.bf16.mxu0 %v743
    %1007 = vmatpush1.bf16.msra.mxu0 %v742
    %1008 = vmatprep.subr.bf16.mxu0 %v739
    %1009 = vmatpush1.bf16.msra.mxu0 %v738
    %1010 = vmatprep.subr.bf16.mxu0 %v799
    %1011 = vmatpush2.bf16.msra.mxu0 %v798
    %1012 = vmatprep.subr.bf16.mxu0 %v795
    %1013 = vmatpush2.bf16.msra.mxu0 %v794
    %1014 = vmatprep.subr.bf16.mxu0 %v791
    %1015 = vmatpush2.bf16.msra.mxu0 %v790
    %1016 = vmatprep.subr.bf16.mxu0 %v787
    %1017 = vmatpush2.bf16.msra.mxu0 %v786
    %1018 = vmatprep.subr.bf16.mxu0 %v783
    %1019 = vmatpush2.bf16.msra.mxu0 %v782
    %1020 = vmatprep.subr.bf16.mxu0 %v779
    %1021 = vmatpush2.bf16.msra.mxu0 %v778
    %1022 = vmatprep.subr.bf16.mxu0 %v775
    %1023 = vmatpush2.bf16.msra.mxu0 %v774
    %1024 = vmatprep.subr.bf16.mxu0 %v771
    %1025 = vmatpush2.bf16.msra.mxu0 %v770
    %1026 = vmatprep.mubr.bf16.mxu0 %v201
    %1027 = vmatmul.mubr.bf16.gmra.mxu0 %v200
    %v1028 = vpop.f32.mrf.mxu0
    %v1029 = vadd.f32 %v337, %v1028
    %v1030 = vpop.f32.mrf.mxu0
    %v1031 = vadd.f32 %v341, %v1030
    %v1032 = vpop.f32.mrf.mxu0
    %v1033 = vpop.f32.mrf.mxu0
    %1034 = vdwg.mxu0
    %1035 = vmatprep.subr.bf16.mxu0 %v831
    %1036 = vmatpush1.bf16.msra.mxu0 %v830
    %1037 = vmatprep.subr.bf16.mxu0 %v827
    %1038 = vmatpush1.bf16.msra.mxu0 %v826
    %1039 = vmatprep.subr.bf16.mxu0 %v823
    %1040 = vmatpush1.bf16.msra.mxu0 %v822
    %1041 = vmatprep.subr.bf16.mxu0 %v819
    %1042 = vmatpush1.bf16.msra.mxu0 %v818
    %1043 = vmatprep.subr.bf16.mxu0 %v815
    %1044 = vmatpush1.bf16.msra.mxu0 %v814
    %1045 = vmatprep.subr.bf16.mxu0 %v811
    %1046 = vmatpush1.bf16.msra.mxu0 %v810
    %1047 = vmatprep.subr.bf16.mxu0 %v807
    %1048 = vmatpush1.bf16.msra.mxu0 %v806
    %1049 = vmatprep.subr.bf16.mxu0 %v803
    %1050 = vmatpush1.bf16.msra.mxu0 %v802
    %1051 = vmatprep.subr.bf16.mxu0 %v863
    %1052 = vmatpush2.bf16.msra.mxu0 %v862
    %1053 = vmatprep.subr.bf16.mxu0 %v859
    %1054 = vmatpush2.bf16.msra.mxu0 %v858
    %1055 = vmatprep.subr.bf16.mxu0 %v855
    %1056 = vmatpush2.bf16.msra.mxu0 %v854
    %1057 = vmatprep.subr.bf16.mxu0 %v851
    %1058 = vmatpush2.bf16.msra.mxu0 %v850
    %1059 = vmatprep.subr.bf16.mxu0 %v847
    %1060 = vmatpush2.bf16.msra.mxu0 %v846
    %1061 = vmatprep.subr.bf16.mxu0 %v843
    %1062 = vmatpush2.bf16.msra.mxu0 %v842
    %1063 = vmatprep.subr.bf16.mxu0 %v839
    %1064 = vmatpush2.bf16.msra.mxu0 %v838
    %1065 = vmatprep.subr.bf16.mxu0 %v835
    %1066 = vmatpush2.bf16.msra.mxu0 %v834
    %1067 = vmatprep.mubr.bf16.mxu0 %v203
    %1068 = vmatmul.mubr.bf16.gmra.mxu0 %v202
    %v1069 = vpop.f32.mrf.mxu0
    %v1070 = vadd.f32 %v1029, %v1069
    %v1071 = vpop.f32.mrf.mxu0
    %v1072 = vadd.f32 %v1031, %v1071
    %v1073 = vpop.f32.mrf.mxu0
    %v1074 = vpop.f32.mrf.mxu0
    %1075 = vdwg.mxu0
    %1076 = vmatprep.subr.bf16.mxu0 %v769
    %1077 = vmatpush1.bf16.msra.mxu0 %v768
    %1078 = vmatprep.subr.bf16.mxu0 %v765
    %1079 = vmatpush1.bf16.msra.mxu0 %v764
    %1080 = vmatprep.subr.bf16.mxu0 %v761
    %1081 = vmatpush1.bf16.msra.mxu0 %v760
    %1082 = vmatprep.subr.bf16.mxu0 %v757
    %1083 = vmatpush1.bf16.msra.mxu0 %v756
    %1084 = vmatprep.subr.bf16.mxu0 %v753
    %1085 = vmatpush1.bf16.msra.mxu0 %v752
    %1086 = vmatprep.subr.bf16.mxu0 %v749
    %1087 = vmatpush1.bf16.msra.mxu0 %v748
    %1088 = vmatprep.subr.bf16.mxu0 %v745
    %1089 = vmatpush1.bf16.msra.mxu0 %v744
    %1090 = vmatprep.subr.bf16.mxu0 %v741
    %1091 = vmatpush1.bf16.msra.mxu0 %v740
    %1092 = vmatprep.subr.bf16.mxu0 %v801
    %1093 = vmatpush2.bf16.msra.mxu0 %v800
    %1094 = vmatprep.subr.bf16.mxu0 %v797
    %1095 = vmatpush2.bf16.msra.mxu0 %v796
    %1096 = vmatprep.subr.bf16.mxu0 %v793
    %1097 = vmatpush2.bf16.msra.mxu0 %v792
    %1098 = vmatprep.subr.bf16.mxu0 %v789
    %1099 = vmatpush2.bf16.msra.mxu0 %v788
    %1100 = vmatprep.subr.bf16.mxu0 %v785
    %1101 = vmatpush2.bf16.msra.mxu0 %v784
    %1102 = vmatprep.subr.bf16.mxu0 %v781
    %1103 = vmatpush2.bf16.msra.mxu0 %v780
    %1104 = vmatprep.subr.bf16.mxu0 %v777
    %1105 = vmatpush2.bf16.msra.mxu0 %v776
    %1106 = vmatprep.subr.bf16.mxu0 %v773
    %1107 = vmatpush2.bf16.msra.mxu0 %v772
    %1108 = vmatprep.mubr.bf16.mxu0 %v201
    %1109 = vmatmul.mubr.bf16.gmra.mxu0 %v200
    %v1110 = vpop.f32.mrf.mxu0
    %v1111 = vadd.f32 %v345, %v1110
    %v1112 = vpop.f32.mrf.mxu0
    %v1113 = vadd.f32 %v349, %v1112
    %v1114 = vpop.f32.mrf.mxu0
    %v1115 = vpop.f32.mrf.mxu0
    %1116 = vdwg.mxu0
    %1117 = vmatprep.subr.bf16.mxu0 %v833
    %1118 = vmatpush1.bf16.msra.mxu0 %v832
    %1119 = vmatprep.subr.bf16.mxu0 %v829
    %1120 = vmatpush1.bf16.msra.mxu0 %v828
    %1121 = vmatprep.subr.bf16.mxu0 %v825
    %1122 = vmatpush1.bf16.msra.mxu0 %v824
    %1123 = vmatprep.subr.bf16.mxu0 %v821
    %1124 = vmatpush1.bf16.msra.mxu0 %v820
    %1125 = vmatprep.subr.bf16.mxu0 %v817
    %1126 = vmatpush1.bf16.msra.mxu0 %v816
    %1127 = vmatprep.subr.bf16.mxu0 %v813
    %1128 = vmatpush1.bf16.msra.mxu0 %v812
    %1129 = vmatprep.subr.bf16.mxu0 %v809
    %1130 = vmatpush1.bf16.msra.mxu0 %v808
    %1131 = vmatprep.subr.bf16.mxu0 %v805
    %1132 = vmatpush1.bf16.msra.mxu0 %v804
    %1133 = vmatprep.subr.bf16.mxu0 %v865
    %1134 = vmatpush2.bf16.msra.mxu0 %v864
    %1135 = vmatprep.subr.bf16.mxu0 %v861
    %1136 = vmatpush2.bf16.msra.mxu0 %v860
    %1137 = vmatprep.subr.bf16.mxu0 %v857
    %1138 = vmatpush2.bf16.msra.mxu0 %v856
    %1139 = vmatprep.subr.bf16.mxu0 %v853
    %1140 = vmatpush2.bf16.msra.mxu0 %v852
    %1141 = vmatprep.subr.bf16.mxu0 %v849
    %1142 = vmatpush2.bf16.msra.mxu0 %v848
    %1143 = vmatprep.subr.bf16.mxu0 %v845
    %1144 = vmatpush2.bf16.msra.mxu0 %v844
    %1145 = vmatprep.subr.bf16.mxu0 %v841
    %1146 = vmatpush2.bf16.msra.mxu0 %v840
    %1147 = vmatprep.subr.bf16.mxu0 %v837
    %1148 = vmatpush2.bf16.msra.mxu0 %v836
    %1149 = vmatprep.mubr.bf16.mxu0 %v203
    %1150 = vmatmul.mubr.bf16.gmra.mxu0 %v202
    %v1151 = vpop.f32.mrf.mxu0
    %v1152 = vadd.f32 %v1111, %v1151
    %v1153 = vpop.f32.mrf.mxu0
    %v1154 = vadd.f32 %v1113, %v1153
    %v1155 = vpop.f32.mrf.mxu0
    %v1156 = vpop.f32.mrf.mxu0
    %1157 = vdwg.mxu0
    %v1158 = vpack.c.bf16 %v1070, %v1070
    %v1159 = vpack.c.bf16 %v1072, %v1072
    %v1160 = vpack.c.bf16 %v1152, %v1152
    %v1161 = vpack.c.bf16 %v1154, %v1154
    %v1162 = vtanh.bf16.pop %v1158
    %v1163 = vtanh.bf16.pop %v1159
    %v1164 = vtanh.bf16.pop %v1160
    %v1165 = vtanh.bf16.pop %v1161
    %v1166 = vld [vmem:[#allocation4] sm:$0xff]
    %v1167 = vld [vmem:[#allocation4 + $0x8] sm:$0xff]
    %v1168 = vld [vmem:[#allocation4 + $0x10] sm:$0xff]
    %v1169 = vld [vmem:[#allocation4 + $0x18] sm:$0xff]
    %v1170 = vld [vmem:[#allocation4 + $0x20] sm:$0xff]
    %v1171 = vld [vmem:[#allocation4 + $0x28] sm:$0xff]
    %v1172 = vld [vmem:[#allocation4 + $0x30] sm:$0xff]
    %v1173 = vld [vmem:[#allocation4 + $0x38] sm:$0xff]
    %v1174 = vld [vmem:[#allocation4 + $0x40] sm:$0xff]
    %v1175 = vld [vmem:[#allocation4 + $0x48] sm:$0xff]
    %v1176 = vld [vmem:[#allocation4 + $0x50] sm:$0xff]
    %v1177 = vld [vmem:[#allocation4 + $0x58] sm:$0xff]
    %v1178 = vld [vmem:[#allocation4 + $0x60] sm:$0xff]
    %v1179 = vld [vmem:[#allocation4 + $0x68] sm:$0xff]
    %v1180 = vld [vmem:[#allocation4 + $0x70] sm:$0xff]
    %v1181 = vld [vmem:[#allocation4 + $0x78] sm:$0xff]
    %v1182 = vld [vmem:[#allocation4 + $0x80] sm:$0xff]
    %v1183 = vld [vmem:[#allocation4 + $0x88] sm:$0xff]
    %v1184 = vld [vmem:[#allocation4 + $0x90] sm:$0xff]
    %v1185 = vld [vmem:[#allocation4 + $0x98] sm:$0xff]
    %v1186 = vld [vmem:[#allocation4 + $0xa0] sm:$0xff]
    %v1187 = vld [vmem:[#allocation4 + $0xa8] sm:$0xff]
    %v1188 = vld [vmem:[#allocation4 + $0xb0] sm:$0xff]
    %v1189 = vld [vmem:[#allocation4 + $0xb8] sm:$0xff]
    %v1190 = vld [vmem:[#allocation4 + $0xc0] sm:$0xff]
    %v1191 = vld [vmem:[#allocation4 + $0xc8] sm:$0xff]
    %v1192 = vld [vmem:[#allocation4 + $0xd0] sm:$0xff]
    %v1193 = vld [vmem:[#allocation4 + $0xd8] sm:$0xff]
    %v1194 = vld [vmem:[#allocation4 + $0xe0] sm:$0xff]
    %v1195 = vld [vmem:[#allocation4 + $0xe8] sm:$0xff]
    %v1196 = vld [vmem:[#allocation4 + $0xf0] sm:$0xff]
    %v1197 = vld [vmem:[#allocation4 + $0xf8] sm:$0xff]
    %v1198 = vld [vmem:[#allocation4 + $0x100] sm:$0xff]
    %v1199 = vld [vmem:[#allocation4 + $0x108] sm:$0xff]
    %v1200 = vld [vmem:[#allocation4 + $0x110] sm:$0xff]
    %v1201 = vld [vmem:[#allocation4 + $0x118] sm:$0xff]
    %v1202 = vld [vmem:[#allocation4 + $0x120] sm:$0xff]
    %v1203 = vld [vmem:[#allocation4 + $0x128] sm:$0xff]
    %v1204 = vld [vmem:[#allocation4 + $0x130] sm:$0xff]
    %v1205 = vld [vmem:[#allocation4 + $0x138] sm:$0xff]
    %v1206 = vld [vmem:[#allocation4 + $0x140] sm:$0xff]
    %v1207 = vld [vmem:[#allocation4 + $0x148] sm:$0xff]
    %v1208 = vld [vmem:[#allocation4 + $0x150] sm:$0xff]
    %v1209 = vld [vmem:[#allocation4 + $0x158] sm:$0xff]
    %v1210 = vld [vmem:[#allocation4 + $0x160] sm:$0xff]
    %v1211 = vld [vmem:[#allocation4 + $0x168] sm:$0xff]
    %v1212 = vld [vmem:[#allocation4 + $0x170] sm:$0xff]
    %v1213 = vld [vmem:[#allocation4 + $0x178] sm:$0xff]
    %v1214 = vld [vmem:[#allocation4 + $0x180] sm:$0xff]
    %v1215 = vld [vmem:[#allocation4 + $0x188] sm:$0xff]
    %v1216 = vld [vmem:[#allocation4 + $0x190] sm:$0xff]
    %v1217 = vld [vmem:[#allocation4 + $0x198] sm:$0xff]
    %v1218 = vld [vmem:[#allocation4 + $0x1a0] sm:$0xff]
    %v1219 = vld [vmem:[#allocation4 + $0x1a8] sm:$0xff]
    %v1220 = vld [vmem:[#allocation4 + $0x1b0] sm:$0xff]
    %v1221 = vld [vmem:[#allocation4 + $0x1b8] sm:$0xff]
    %v1222 = vld [vmem:[#allocation4 + $0x1c0] sm:$0xff]
    %v1223 = vld [vmem:[#allocation4 + $0x1c8] sm:$0xff]
    %v1224 = vld [vmem:[#allocation4 + $0x1d0] sm:$0xff]
    %v1225 = vld [vmem:[#allocation4 + $0x1d8] sm:$0xff]
    %v1226 = vld [vmem:[#allocation4 + $0x1e0] sm:$0xff]
    %v1227 = vld [vmem:[#allocation4 + $0x1e8] sm:$0xff]
    %v1228 = vld [vmem:[#allocation4 + $0x1f0] sm:$0xff]
    %v1229 = vld [vmem:[#allocation4 + $0x1f8] sm:$0xff]
    %v1230 = vld [vmem:[#allocation4 + $0x200] sm:$0xff]
    %v1231 = vld [vmem:[#allocation4 + $0x208] sm:$0xff]
    %v1232 = vld [vmem:[#allocation4 + $0x210] sm:$0xff]
    %v1233 = vld [vmem:[#allocation4 + $0x218] sm:$0xff]
    %v1234 = vld [vmem:[#allocation4 + $0x220] sm:$0xff]
    %v1235 = vld [vmem:[#allocation4 + $0x228] sm:$0xff]
    %v1236 = vld [vmem:[#allocation4 + $0x230] sm:$0xff]
    %v1237 = vld [vmem:[#allocation4 + $0x238] sm:$0xff]
    %v1238 = vld [vmem:[#allocation4 + $0x240] sm:$0xff]
    %v1239 = vld [vmem:[#allocation4 + $0x248] sm:$0xff]
    %v1240 = vld [vmem:[#allocation4 + $0x250] sm:$0xff]
    %v1241 = vld [vmem:[#allocation4 + $0x258] sm:$0xff]
    %v1242 = vld [vmem:[#allocation4 + $0x260] sm:$0xff]
    %v1243 = vld [vmem:[#allocation4 + $0x268] sm:$0xff]
    %v1244 = vld [vmem:[#allocation4 + $0x270] sm:$0xff]
    %v1245 = vld [vmem:[#allocation4 + $0x278] sm:$0xff]
    %v1246 = vld [vmem:[#allocation4 + $0x280] sm:$0xff]
    %v1247 = vld [vmem:[#allocation4 + $0x288] sm:$0xff]
    %v1248 = vld [vmem:[#allocation4 + $0x290] sm:$0xff]
    %v1249 = vld [vmem:[#allocation4 + $0x298] sm:$0xff]
    %v1250 = vld [vmem:[#allocation4 + $0x2a0] sm:$0xff]
    %v1251 = vld [vmem:[#allocation4 + $0x2a8] sm:$0xff]
    %v1252 = vld [vmem:[#allocation4 + $0x2b0] sm:$0xff]
    %v1253 = vld [vmem:[#allocation4 + $0x2b8] sm:$0xff]
    %v1254 = vld [vmem:[#allocation4 + $0x2c0] sm:$0xff]
    %v1255 = vld [vmem:[#allocation4 + $0x2c8] sm:$0xff]
    %v1256 = vld [vmem:[#allocation4 + $0x2d0] sm:$0xff]
    %v1257 = vld [vmem:[#allocation4 + $0x2d8] sm:$0xff]
    %v1258 = vld [vmem:[#allocation4 + $0x2e0] sm:$0xff]
    %v1259 = vld [vmem:[#allocation4 + $0x2e8] sm:$0xff]
    %v1260 = vld [vmem:[#allocation4 + $0x2f0] sm:$0xff]
    %v1261 = vld [vmem:[#allocation4 + $0x2f8] sm:$0xff]
    %v1262 = vld [vmem:[#allocation4 + $0x300] sm:$0xff]
    %v1263 = vld [vmem:[#allocation4 + $0x308] sm:$0xff]
    %v1264 = vld [vmem:[#allocation4 + $0x310] sm:$0xff]
    %v1265 = vld [vmem:[#allocation4 + $0x318] sm:$0xff]
    %v1266 = vld [vmem:[#allocation4 + $0x320] sm:$0xff]
    %v1267 = vld [vmem:[#allocation4 + $0x328] sm:$0xff]
    %v1268 = vld [vmem:[#allocation4 + $0x330] sm:$0xff]
    %v1269 = vld [vmem:[#allocation4 + $0x338] sm:$0xff]
    %v1270 = vld [vmem:[#allocation4 + $0x340] sm:$0xff]
    %v1271 = vld [vmem:[#allocation4 + $0x348] sm:$0xff]
    %v1272 = vld [vmem:[#allocation4 + $0x350] sm:$0xff]
    %v1273 = vld [vmem:[#allocation4 + $0x358] sm:$0xff]
    %v1274 = vld [vmem:[#allocation4 + $0x360] sm:$0xff]
    %v1275 = vld [vmem:[#allocation4 + $0x368] sm:$0xff]
    %v1276 = vld [vmem:[#allocation4 + $0x370] sm:$0xff]
    %v1277 = vld [vmem:[#allocation4 + $0x378] sm:$0xff]
    %v1278 = vld [vmem:[#allocation4 + $0x380] sm:$0xff]
    %v1279 = vld [vmem:[#allocation4 + $0x388] sm:$0xff]
    %v1280 = vld [vmem:[#allocation4 + $0x390] sm:$0xff]
    %v1281 = vld [vmem:[#allocation4 + $0x398] sm:$0xff]
    %v1282 = vld [vmem:[#allocation4 + $0x3a0] sm:$0xff]
    %v1283 = vld [vmem:[#allocation4 + $0x3a8] sm:$0xff]
    %v1284 = vld [vmem:[#allocation4 + $0x3b0] sm:$0xff]
    %v1285 = vld [vmem:[#allocation4 + $0x3b8] sm:$0xff]
    %v1286 = vld [vmem:[#allocation4 + $0x3c0] sm:$0xff]
    %v1287 = vld [vmem:[#allocation4 + $0x3c8] sm:$0xff]
    %v1288 = vld [vmem:[#allocation4 + $0x3d0] sm:$0xff]
    %v1289 = vld [vmem:[#allocation4 + $0x3d8] sm:$0xff]
    %v1290 = vld [vmem:[#allocation4 + $0x3e0] sm:$0xff]
    %v1291 = vld [vmem:[#allocation4 + $0x3e8] sm:$0xff]
    %v1292 = vld [vmem:[#allocation4 + $0x3f0] sm:$0xff]
    %v1293 = vld [vmem:[#allocation4 + $0x3f8] sm:$0xff]
    %v1294 = vld [vmem:[%s6] sm:$0xf]
    %v1296 = vlaneseq
    %v1297 = vshrl.u32 %v1296, 7
    %v1298 = vsub.s32 0, %v1297
    %v1299 = vrot.slane %v1294, %v1298
    %v1300 = vlaneseq
    %v1301 = vshrl.u32 %v1300, 7
    %v1302 = vsub.s32 1, %v1301
    %v1303 = vrot.slane %v1294, %v1302
    %v1304 = vlaneseq
    %v1305 = vshrl.u32 %v1304, 7
    %v1306 = vsub.s32 2, %v1305
    %v1307 = vrot.slane %v1294, %v1306
    %v1308 = vlaneseq
    %v1309 = vshrl.u32 %v1308, 7
    %v1310 = vsub.s32 3, %v1309
    %v1311 = vrot.slane %v1294, %v1310
    %v1444 = vunpack.c.l.b16 %v1166
    %v1445 = vunpack.c.h.b16 %v1166
    %v1446 = vunpack.c.l.b16 %v1167
    %v1447 = vunpack.c.h.b16 %v1167
    %v1448 = vunpack.c.l.b16 %v1168
    %v1449 = vunpack.c.h.b16 %v1168
    %v1450 = vunpack.c.l.b16 %v1169
    %v1451 = vunpack.c.h.b16 %v1169
    %v1452 = vunpack.c.l.b16 %v1170
    %v1453 = vunpack.c.h.b16 %v1170
    %v1454 = vunpack.c.l.b16 %v1171
    %v1455 = vunpack.c.h.b16 %v1171
    %v1456 = vunpack.c.l.b16 %v1172
    %v1457 = vunpack.c.h.b16 %v1172
    %v1458 = vunpack.c.l.b16 %v1173
    %v1459 = vunpack.c.h.b16 %v1173
    %v1460 = vunpack.c.l.b16 %v1174
    %v1461 = vunpack.c.h.b16 %v1174
    %v1462 = vunpack.c.l.b16 %v1175
    %v1463 = vunpack.c.h.b16 %v1175
    %v1464 = vunpack.c.l.b16 %v1176
    %v1465 = vunpack.c.h.b16 %v1176
    %v1466 = vunpack.c.l.b16 %v1177
    %v1467 = vunpack.c.h.b16 %v1177
    %v1468 = vunpack.c.l.b16 %v1178
    %v1469 = vunpack.c.h.b16 %v1178
    %v1470 = vunpack.c.l.b16 %v1179
    %v1471 = vunpack.c.h.b16 %v1179
    %v1472 = vunpack.c.l.b16 %v1180
    %v1473 = vunpack.c.h.b16 %v1180
    %v1474 = vunpack.c.l.b16 %v1181
    %v1475 = vunpack.c.h.b16 %v1181
    %v1476 = vunpack.c.l.b16 %v1182
    %v1477 = vunpack.c.h.b16 %v1182
    %v1478 = vunpack.c.l.b16 %v1183
    %v1479 = vunpack.c.h.b16 %v1183
    %v1480 = vunpack.c.l.b16 %v1184
    %v1481 = vunpack.c.h.b16 %v1184
    %v1482 = vunpack.c.l.b16 %v1185
    %v1483 = vunpack.c.h.b16 %v1185
    %v1484 = vunpack.c.l.b16 %v1186
    %v1485 = vunpack.c.h.b16 %v1186
    %v1486 = vunpack.c.l.b16 %v1187
    %v1487 = vunpack.c.h.b16 %v1187
    %v1488 = vunpack.c.l.b16 %v1188
    %v1489 = vunpack.c.h.b16 %v1188
    %v1490 = vunpack.c.l.b16 %v1189
    %v1491 = vunpack.c.h.b16 %v1189
    %v1492 = vunpack.c.l.b16 %v1190
    %v1493 = vunpack.c.h.b16 %v1190
    %v1494 = vunpack.c.l.b16 %v1191
    %v1495 = vunpack.c.h.b16 %v1191
    %v1496 = vunpack.c.l.b16 %v1192
    %v1497 = vunpack.c.h.b16 %v1192
    %v1498 = vunpack.c.l.b16 %v1193
    %v1499 = vunpack.c.h.b16 %v1193
    %v1500 = vunpack.c.l.b16 %v1194
    %v1501 = vunpack.c.h.b16 %v1194
    %v1502 = vunpack.c.l.b16 %v1195
    %v1503 = vunpack.c.h.b16 %v1195
    %v1504 = vunpack.c.l.b16 %v1196
    %v1505 = vunpack.c.h.b16 %v1196
    %v1506 = vunpack.c.l.b16 %v1197
    %v1507 = vunpack.c.h.b16 %v1197
    %v1508 = vunpack.c.l.b16 %v1198
    %v1509 = vunpack.c.h.b16 %v1198
    %v1510 = vunpack.c.l.b16 %v1199
    %v1511 = vunpack.c.h.b16 %v1199
    %v1512 = vunpack.c.l.b16 %v1200
    %v1513 = vunpack.c.h.b16 %v1200
    %v1514 = vunpack.c.l.b16 %v1201
    %v1515 = vunpack.c.h.b16 %v1201
    %v1516 = vunpack.c.l.b16 %v1202
    %v1517 = vunpack.c.h.b16 %v1202
    %v1518 = vunpack.c.l.b16 %v1203
    %v1519 = vunpack.c.h.b16 %v1203
    %v1520 = vunpack.c.l.b16 %v1204
    %v1521 = vunpack.c.h.b16 %v1204
    %v1522 = vunpack.c.l.b16 %v1205
    %v1523 = vunpack.c.h.b16 %v1205
    %v1524 = vunpack.c.l.b16 %v1206
    %v1525 = vunpack.c.h.b16 %v1206
    %v1526 = vunpack.c.l.b16 %v1207
    %v1527 = vunpack.c.h.b16 %v1207
    %v1528 = vunpack.c.l.b16 %v1208
    %v1529 = vunpack.c.h.b16 %v1208
    %v1530 = vunpack.c.l.b16 %v1209
    %v1531 = vunpack.c.h.b16 %v1209
    %v1532 = vunpack.c.l.b16 %v1210
    %v1533 = vunpack.c.h.b16 %v1210
    %v1534 = vunpack.c.l.b16 %v1211
    %v1535 = vunpack.c.h.b16 %v1211
    %v1536 = vunpack.c.l.b16 %v1212
    %v1537 = vunpack.c.h.b16 %v1212
    %v1538 = vunpack.c.l.b16 %v1213
    %v1539 = vunpack.c.h.b16 %v1213
    %v1540 = vunpack.c.l.b16 %v1214
    %v1541 = vunpack.c.h.b16 %v1214
    %v1542 = vunpack.c.l.b16 %v1215
    %v1543 = vunpack.c.h.b16 %v1215
    %v1544 = vunpack.c.l.b16 %v1216
    %v1545 = vunpack.c.h.b16 %v1216
    %v1546 = vunpack.c.l.b16 %v1217
    %v1547 = vunpack.c.h.b16 %v1217
    %v1548 = vunpack.c.l.b16 %v1218
    %v1549 = vunpack.c.h.b16 %v1218
    %v1550 = vunpack.c.l.b16 %v1219
    %v1551 = vunpack.c.h.b16 %v1219
    %v1552 = vunpack.c.l.b16 %v1220
    %v1553 = vunpack.c.h.b16 %v1220
    %v1554 = vunpack.c.l.b16 %v1221
    %v1555 = vunpack.c.h.b16 %v1221
    %v1556 = vunpack.c.l.b16 %v1222
    %v1557 = vunpack.c.h.b16 %v1222
    %v1558 = vunpack.c.l.b16 %v1223
    %v1559 = vunpack.c.h.b16 %v1223
    %v1560 = vunpack.c.l.b16 %v1224
    %v1561 = vunpack.c.h.b16 %v1224
    %v1562 = vunpack.c.l.b16 %v1225
    %v1563 = vunpack.c.h.b16 %v1225
    %v1564 = vunpack.c.l.b16 %v1226
    %v1565 = vunpack.c.h.b16 %v1226
    %v1566 = vunpack.c.l.b16 %v1227
    %v1567 = vunpack.c.h.b16 %v1227
    %v1568 = vunpack.c.l.b16 %v1228
    %v1569 = vunpack.c.h.b16 %v1228
    %v1570 = vunpack.c.l.b16 %v1229
    %v1571 = vunpack.c.h.b16 %v1229
    %v1572 = vunpack.c.l.b16 %v1230
    %v1573 = vunpack.c.h.b16 %v1230
    %v1574 = vunpack.c.l.b16 %v1231
    %v1575 = vunpack.c.h.b16 %v1231
    %v1576 = vunpack.c.l.b16 %v1232
    %v1577 = vunpack.c.h.b16 %v1232
    %v1578 = vunpack.c.l.b16 %v1233
    %v1579 = vunpack.c.h.b16 %v1233
    %v1580 = vunpack.c.l.b16 %v1234
    %v1581 = vunpack.c.h.b16 %v1234
    %v1582 = vunpack.c.l.b16 %v1235
    %v1583 = vunpack.c.h.b16 %v1235
    %v1584 = vunpack.c.l.b16 %v1236
    %v1585 = vunpack.c.h.b16 %v1236
    %v1586 = vunpack.c.l.b16 %v1237
    %v1587 = vunpack.c.h.b16 %v1237
    %v1588 = vunpack.c.l.b16 %v1238
    %v1589 = vunpack.c.h.b16 %v1238
    %v1590 = vunpack.c.l.b16 %v1239
    %v1591 = vunpack.c.h.b16 %v1239
    %v1592 = vunpack.c.l.b16 %v1240
    %v1593 = vunpack.c.h.b16 %v1240
    %v1594 = vunpack.c.l.b16 %v1241
    %v1595 = vunpack.c.h.b16 %v1241
    %v1596 = vunpack.c.l.b16 %v1242
    %v1597 = vunpack.c.h.b16 %v1242
    %v1598 = vunpack.c.l.b16 %v1243
    %v1599 = vunpack.c.h.b16 %v1243
    %v1600 = vunpack.c.l.b16 %v1244
    %v1601 = vunpack.c.h.b16 %v1244
    %v1602 = vunpack.c.l.b16 %v1245
    %v1603 = vunpack.c.h.b16 %v1245
    %v1604 = vunpack.c.l.b16 %v1246
    %v1605 = vunpack.c.h.b16 %v1246
    %v1606 = vunpack.c.l.b16 %v1247
    %v1607 = vunpack.c.h.b16 %v1247
    %v1608 = vunpack.c.l.b16 %v1248
    %v1609 = vunpack.c.h.b16 %v1248
    %v1610 = vunpack.c.l.b16 %v1249
    %v1611 = vunpack.c.h.b16 %v1249
    %v1612 = vunpack.c.l.b16 %v1250
    %v1613 = vunpack.c.h.b16 %v1250
    %v1614 = vunpack.c.l.b16 %v1251
    %v1615 = vunpack.c.h.b16 %v1251
    %v1616 = vunpack.c.l.b16 %v1252
    %v1617 = vunpack.c.h.b16 %v1252
    %v1618 = vunpack.c.l.b16 %v1253
    %v1619 = vunpack.c.h.b16 %v1253
    %v1620 = vunpack.c.l.b16 %v1254
    %v1621 = vunpack.c.h.b16 %v1254
    %v1622 = vunpack.c.l.b16 %v1255
    %v1623 = vunpack.c.h.b16 %v1255
    %v1624 = vunpack.c.l.b16 %v1256
    %v1625 = vunpack.c.h.b16 %v1256
    %v1626 = vunpack.c.l.b16 %v1257
    %v1627 = vunpack.c.h.b16 %v1257
    %v1628 = vunpack.c.l.b16 %v1258
    %v1629 = vunpack.c.h.b16 %v1258
    %v1630 = vunpack.c.l.b16 %v1259
    %v1631 = vunpack.c.h.b16 %v1259
    %v1632 = vunpack.c.l.b16 %v1260
    %v1633 = vunpack.c.h.b16 %v1260
    %v1634 = vunpack.c.l.b16 %v1261
    %v1635 = vunpack.c.h.b16 %v1261
    %v1636 = vunpack.c.l.b16 %v1262
    %v1637 = vunpack.c.h.b16 %v1262
    %v1638 = vunpack.c.l.b16 %v1263
    %v1639 = vunpack.c.h.b16 %v1263
    %v1640 = vunpack.c.l.b16 %v1264
    %v1641 = vunpack.c.h.b16 %v1264
    %v1642 = vunpack.c.l.b16 %v1265
    %v1643 = vunpack.c.h.b16 %v1265
    %v1644 = vunpack.c.l.b16 %v1266
    %v1645 = vunpack.c.h.b16 %v1266
    %v1646 = vunpack.c.l.b16 %v1267
    %v1647 = vunpack.c.h.b16 %v1267
    %v1648 = vunpack.c.l.b16 %v1268
    %v1649 = vunpack.c.h.b16 %v1268
    %v1650 = vunpack.c.l.b16 %v1269
    %v1651 = vunpack.c.h.b16 %v1269
    %v1652 = vunpack.c.l.b16 %v1270
    %v1653 = vunpack.c.h.b16 %v1270
    %v1654 = vunpack.c.l.b16 %v1271
    %v1655 = vunpack.c.h.b16 %v1271
    %v1656 = vunpack.c.l.b16 %v1272
    %v1657 = vunpack.c.h.b16 %v1272
    %v1658 = vunpack.c.l.b16 %v1273
    %v1659 = vunpack.c.h.b16 %v1273
    %v1660 = vunpack.c.l.b16 %v1274
    %v1661 = vunpack.c.h.b16 %v1274
    %v1662 = vunpack.c.l.b16 %v1275
    %v1663 = vunpack.c.h.b16 %v1275
    %v1664 = vunpack.c.l.b16 %v1276
    %v1665 = vunpack.c.h.b16 %v1276
    %v1666 = vunpack.c.l.b16 %v1277
    %v1667 = vunpack.c.h.b16 %v1277
    %v1668 = vunpack.c.l.b16 %v1278
    %v1669 = vunpack.c.h.b16 %v1278
    %v1670 = vunpack.c.l.b16 %v1279
    %v1671 = vunpack.c.h.b16 %v1279
    %v1672 = vunpack.c.l.b16 %v1280
    %v1673 = vunpack.c.h.b16 %v1280
    %v1674 = vunpack.c.l.b16 %v1281
    %v1675 = vunpack.c.h.b16 %v1281
    %v1676 = vunpack.c.l.b16 %v1282
    %v1677 = vunpack.c.h.b16 %v1282
    %v1678 = vunpack.c.l.b16 %v1283
    %v1679 = vunpack.c.h.b16 %v1283
    %v1680 = vunpack.c.l.b16 %v1284
    %v1681 = vunpack.c.h.b16 %v1284
    %v1682 = vunpack.c.l.b16 %v1285
    %v1683 = vunpack.c.h.b16 %v1285
    %v1684 = vunpack.c.l.b16 %v1286
    %v1685 = vunpack.c.h.b16 %v1286
    %v1686 = vunpack.c.l.b16 %v1287
    %v1687 = vunpack.c.h.b16 %v1287
    %v1688 = vunpack.c.l.b16 %v1288
    %v1689 = vunpack.c.h.b16 %v1288
    %v1690 = vunpack.c.l.b16 %v1289
    %v1691 = vunpack.c.h.b16 %v1289
    %v1692 = vunpack.c.l.b16 %v1290
    %v1693 = vunpack.c.h.b16 %v1290
    %v1694 = vunpack.c.l.b16 %v1291
    %v1695 = vunpack.c.h.b16 %v1291
    %v1696 = vunpack.c.l.b16 %v1292
    %v1697 = vunpack.c.h.b16 %v1292
    %v1698 = vunpack.c.l.b16 %v1293
    %v1699 = vunpack.c.h.b16 %v1293
    %v1700 = vpack.c.b16 %v1448, %v1444
    %v1701 = vpack.c.b16 %v1449, %v1445
    %v1702 = vpack.c.b16 %v1450, %v1446
    %v1703 = vpack.c.b16 %v1451, %v1447
    %v1704 = vpack.c.b16 %v1456, %v1452
    %v1705 = vpack.c.b16 %v1457, %v1453
    %v1706 = vpack.c.b16 %v1458, %v1454
    %v1707 = vpack.c.b16 %v1459, %v1455
    %v1708 = vpack.c.b16 %v1464, %v1460
    %v1709 = vpack.c.b16 %v1465, %v1461
    %v1710 = vpack.c.b16 %v1466, %v1462
    %v1711 = vpack.c.b16 %v1467, %v1463
    %v1712 = vpack.c.b16 %v1472, %v1468
    %v1713 = vpack.c.b16 %v1473, %v1469
    %v1714 = vpack.c.b16 %v1474, %v1470
    %v1715 = vpack.c.b16 %v1475, %v1471
    %v1716 = vpack.c.b16 %v1480, %v1476
    %v1717 = vpack.c.b16 %v1481, %v1477
    %v1718 = vpack.c.b16 %v1482, %v1478
    %v1719 = vpack.c.b16 %v1483, %v1479
    %v1720 = vpack.c.b16 %v1488, %v1484
    %v1721 = vpack.c.b16 %v1489, %v1485
    %v1722 = vpack.c.b16 %v1490, %v1486
    %v1723 = vpack.c.b16 %v1491, %v1487
    %v1724 = vpack.c.b16 %v1496, %v1492
    %v1725 = vpack.c.b16 %v1497, %v1493
    %v1726 = vpack.c.b16 %v1498, %v1494
    %v1727 = vpack.c.b16 %v1499, %v1495
    %v1728 = vpack.c.b16 %v1504, %v1500
    %v1729 = vpack.c.b16 %v1505, %v1501
    %v1730 = vpack.c.b16 %v1506, %v1502
    %v1731 = vpack.c.b16 %v1507, %v1503
    %v1732 = vpack.c.b16 %v1512, %v1508
    %v1733 = vpack.c.b16 %v1513, %v1509
    %v1734 = vpack.c.b16 %v1514, %v1510
    %v1735 = vpack.c.b16 %v1515, %v1511
    %v1736 = vpack.c.b16 %v1520, %v1516
    %v1737 = vpack.c.b16 %v1521, %v1517
    %v1738 = vpack.c.b16 %v1522, %v1518
    %v1739 = vpack.c.b16 %v1523, %v1519
    %v1740 = vpack.c.b16 %v1528, %v1524
    %v1741 = vpack.c.b16 %v1529, %v1525
    %v1742 = vpack.c.b16 %v1530, %v1526
    %v1743 = vpack.c.b16 %v1531, %v1527
    %v1744 = vpack.c.b16 %v1536, %v1532
    %v1745 = vpack.c.b16 %v1537, %v1533
    %v1746 = vpack.c.b16 %v1538, %v1534
    %v1747 = vpack.c.b16 %v1539, %v1535
    %v1748 = vpack.c.b16 %v1544, %v1540
    %v1749 = vpack.c.b16 %v1545, %v1541
    %v1750 = vpack.c.b16 %v1546, %v1542
    %v1751 = vpack.c.b16 %v1547, %v1543
    %v1752 = vpack.c.b16 %v1552, %v1548
    %v1753 = vpack.c.b16 %v1553, %v1549
    %v1754 = vpack.c.b16 %v1554, %v1550
    %v1755 = vpack.c.b16 %v1555, %v1551
    %v1756 = vpack.c.b16 %v1560, %v1556
    %v1757 = vpack.c.b16 %v1561, %v1557
    %v1758 = vpack.c.b16 %v1562, %v1558
    %v1759 = vpack.c.b16 %v1563, %v1559
    %v1760 = vpack.c.b16 %v1568, %v1564
    %v1761 = vpack.c.b16 %v1569, %v1565
    %v1762 = vpack.c.b16 %v1570, %v1566
    %v1763 = vpack.c.b16 %v1571, %v1567
    %v1764 = vpack.c.b16 %v1576, %v1572
    %v1765 = vpack.c.b16 %v1577, %v1573
    %v1766 = vpack.c.b16 %v1578, %v1574
    %v1767 = vpack.c.b16 %v1579, %v1575
    %v1768 = vpack.c.b16 %v1584, %v1580
    %v1769 = vpack.c.b16 %v1585, %v1581
    %v1770 = vpack.c.b16 %v1586, %v1582
    %v1771 = vpack.c.b16 %v1587, %v1583
    %v1772 = vpack.c.b16 %v1592, %v1588
    %v1773 = vpack.c.b16 %v1593, %v1589
    %v1774 = vpack.c.b16 %v1594, %v1590
    %v1775 = vpack.c.b16 %v1595, %v1591
    %v1776 = vpack.c.b16 %v1600, %v1596
    %v1777 = vpack.c.b16 %v1601, %v1597
    %v1778 = vpack.c.b16 %v1602, %v1598
    %v1779 = vpack.c.b16 %v1603, %v1599
    %v1780 = vpack.c.b16 %v1608, %v1604
    %v1781 = vpack.c.b16 %v1609, %v1605
    %v1782 = vpack.c.b16 %v1610, %v1606
    %v1783 = vpack.c.b16 %v1611, %v1607
    %v1784 = vpack.c.b16 %v1616, %v1612
    %v1785 = vpack.c.b16 %v1617, %v1613
    %v1786 = vpack.c.b16 %v1618, %v1614
    %v1787 = vpack.c.b16 %v1619, %v1615
    %v1788 = vpack.c.b16 %v1624, %v1620
    %v1789 = vpack.c.b16 %v1625, %v1621
    %v1790 = vpack.c.b16 %v1626, %v1622
    %v1791 = vpack.c.b16 %v1627, %v1623
    %v1792 = vpack.c.b16 %v1632, %v1628
    %v1793 = vpack.c.b16 %v1633, %v1629
    %v1794 = vpack.c.b16 %v1634, %v1630
    %v1795 = vpack.c.b16 %v1635, %v1631
    %v1796 = vpack.c.b16 %v1640, %v1636
    %v1797 = vpack.c.b16 %v1641, %v1637
    %v1798 = vpack.c.b16 %v1642, %v1638
    %v1799 = vpack.c.b16 %v1643, %v1639
    %v1800 = vpack.c.b16 %v1648, %v1644
    %v1801 = vpack.c.b16 %v1649, %v1645
    %v1802 = vpack.c.b16 %v1650, %v1646
    %v1803 = vpack.c.b16 %v1651, %v1647
    %v1804 = vpack.c.b16 %v1656, %v1652
    %v1805 = vpack.c.b16 %v1657, %v1653
    %v1806 = vpack.c.b16 %v1658, %v1654
    %v1807 = vpack.c.b16 %v1659, %v1655
    %v1808 = vpack.c.b16 %v1664, %v1660
    %v1809 = vpack.c.b16 %v1665, %v1661
    %v1810 = vpack.c.b16 %v1666, %v1662
    %v1811 = vpack.c.b16 %v1667, %v1663
    %v1812 = vpack.c.b16 %v1672, %v1668
    %v1813 = vpack.c.b16 %v1673, %v1669
    %v1814 = vpack.c.b16 %v1674, %v1670
    %v1815 = vpack.c.b16 %v1675, %v1671
    %v1816 = vpack.c.b16 %v1680, %v1676
    %v1817 = vpack.c.b16 %v1681, %v1677
    %v1818 = vpack.c.b16 %v1682, %v1678
    %v1819 = vpack.c.b16 %v1683, %v1679
    %v1820 = vpack.c.b16 %v1688, %v1684
    %v1821 = vpack.c.b16 %v1689, %v1685
    %v1822 = vpack.c.b16 %v1690, %v1686
    %v1823 = vpack.c.b16 %v1691, %v1687
    %v1824 = vpack.c.b16 %v1696, %v1692
    %v1825 = vpack.c.b16 %v1697, %v1693
    %v1826 = vpack.c.b16 %v1698, %v1694
    %v1827 = vpack.c.b16 %v1699, %v1695
    %1956 = vmatprep.subr.bf16.mxu0 %v1729
    %1957 = vmatpush1.bf16.msra.mxu0 %v1728
    %1958 = vmatprep.subr.bf16.mxu0 %v1725
    %1959 = vmatpush1.bf16.msra.mxu0 %v1724
    %1960 = vmatprep.subr.bf16.mxu0 %v1721
    %1961 = vmatpush1.bf16.msra.mxu0 %v1720
    %1962 = vmatprep.subr.bf16.mxu0 %v1717
    %1963 = vmatpush1.bf16.msra.mxu0 %v1716
    %1964 = vmatprep.subr.bf16.mxu0 %v1713
    %1965 = vmatpush1.bf16.msra.mxu0 %v1712
    %1966 = vmatprep.subr.bf16.mxu0 %v1709
    %1967 = vmatpush1.bf16.msra.mxu0 %v1708
    %1968 = vmatprep.subr.bf16.mxu0 %v1705
    %1969 = vmatpush1.bf16.msra.mxu0 %v1704
    %1970 = vmatprep.subr.bf16.mxu0 %v1701
    %1971 = vmatpush1.bf16.msra.mxu0 %v1700
    %1972 = vmatprep.subr.bf16.mxu0 %v1761
    %1973 = vmatpush2.bf16.msra.mxu0 %v1760
    %1974 = vmatprep.subr.bf16.mxu0 %v1757
    %1975 = vmatpush2.bf16.msra.mxu0 %v1756
    %1976 = vmatprep.subr.bf16.mxu0 %v1753
    %1977 = vmatpush2.bf16.msra.mxu0 %v1752
    %1978 = vmatprep.subr.bf16.mxu0 %v1749
    %1979 = vmatpush2.bf16.msra.mxu0 %v1748
    %1980 = vmatprep.subr.bf16.mxu0 %v1745
    %1981 = vmatpush2.bf16.msra.mxu0 %v1744
    %1982 = vmatprep.subr.bf16.mxu0 %v1741
    %1983 = vmatpush2.bf16.msra.mxu0 %v1740
    %1984 = vmatprep.subr.bf16.mxu0 %v1737
    %1985 = vmatpush2.bf16.msra.mxu0 %v1736
    %1986 = vmatprep.subr.bf16.mxu0 %v1733
    %1987 = vmatpush2.bf16.msra.mxu0 %v1732
    %1988 = vmatprep.mubr.bf16.mxu0 %v1163
    %1989 = vmatmul.mubr.bf16.gmra.mxu0 %v1162
    %v1990 = vpop.f32.mrf.mxu0
    %v1991 = vadd.f32 %v1299, %v1990
    %v1992 = vpop.f32.mrf.mxu0
    %v1993 = vadd.f32 %v1303, %v1992
    %v1994 = vpop.f32.mrf.mxu0
    %v1995 = vpop.f32.mrf.mxu0
    %1996 = vdwg.mxu0
    %1997 = vmatprep.subr.bf16.mxu0 %v1793
    %1998 = vmatpush1.bf16.msra.mxu0 %v1792
    %1999 = vmatprep.subr.bf16.mxu0 %v1789
    %2000 = vmatpush1.bf16.msra.mxu0 %v1788
    %2001 = vmatprep.subr.bf16.mxu0 %v1785
    %2002 = vmatpush1.bf16.msra.mxu0 %v1784
    %2003 = vmatprep.subr.bf16.mxu0 %v1781
    %2004 = vmatpush1.bf16.msra.mxu0 %v1780
    %2005 = vmatprep.subr.bf16.mxu0 %v1777
    %2006 = vmatpush1.bf16.msra.mxu0 %v1776
    %2007 = vmatprep.subr.bf16.mxu0 %v1773
    %2008 = vmatpush1.bf16.msra.mxu0 %v1772
    %2009 = vmatprep.subr.bf16.mxu0 %v1769
    %2010 = vmatpush1.bf16.msra.mxu0 %v1768
    %2011 = vmatprep.subr.bf16.mxu0 %v1765
    %2012 = vmatpush1.bf16.msra.mxu0 %v1764
    %2013 = vmatprep.subr.bf16.mxu0 %v1825
    %2014 = vmatpush2.bf16.msra.mxu0 %v1824
    %2015 = vmatprep.subr.bf16.mxu0 %v1821
    %2016 = vmatpush2.bf16.msra.mxu0 %v1820
    %2017 = vmatprep.subr.bf16.mxu0 %v1817
    %2018 = vmatpush2.bf16.msra.mxu0 %v1816
    %2019 = vmatprep.subr.bf16.mxu0 %v1813
    %2020 = vmatpush2.bf16.msra.mxu0 %v1812
    %2021 = vmatprep.subr.bf16.mxu0 %v1809
    %2022 = vmatpush2.bf16.msra.mxu0 %v1808
    %2023 = vmatprep.subr.bf16.mxu0 %v1805
    %2024 = vmatpush2.bf16.msra.mxu0 %v1804
    %2025 = vmatprep.subr.bf16.mxu0 %v1801
    %2026 = vmatpush2.bf16.msra.mxu0 %v1800
    %2027 = vmatprep.subr.bf16.mxu0 %v1797
    %2028 = vmatpush2.bf16.msra.mxu0 %v1796
    %2029 = vmatprep.mubr.bf16.mxu0 %v1165
    %2030 = vmatmul.mubr.bf16.gmra.mxu0 %v1164
    %v2031 = vpop.f32.mrf.mxu0
    %v2032 = vadd.f32 %v1991, %v2031
    %v2033 = vpop.f32.mrf.mxu0
    %v2034 = vadd.f32 %v1993, %v2033
    %v2035 = vpop.f32.mrf.mxu0
    %v2036 = vpop.f32.mrf.mxu0
    %2037 = vdwg.mxu0
    %2038 = vmatprep.subr.bf16.mxu0 %v1731
    %2039 = vmatpush1.bf16.msra.mxu0 %v1730
    %2040 = vmatprep.subr.bf16.mxu0 %v1727
    %2041 = vmatpush1.bf16.msra.mxu0 %v1726
    %2042 = vmatprep.subr.bf16.mxu0 %v1723
    %2043 = vmatpush1.bf16.msra.mxu0 %v1722
    %2044 = vmatprep.subr.bf16.mxu0 %v1719
    %2045 = vmatpush1.bf16.msra.mxu0 %v1718
    %2046 = vmatprep.subr.bf16.mxu0 %v1715
    %2047 = vmatpush1.bf16.msra.mxu0 %v1714
    %2048 = vmatprep.subr.bf16.mxu0 %v1711
    %2049 = vmatpush1.bf16.msra.mxu0 %v1710
    %2050 = vmatprep.subr.bf16.mxu0 %v1707
    %2051 = vmatpush1.bf16.msra.mxu0 %v1706
    %2052 = vmatprep.subr.bf16.mxu0 %v1703
    %2053 = vmatpush1.bf16.msra.mxu0 %v1702
    %2054 = vmatprep.subr.bf16.mxu0 %v1763
    %2055 = vmatpush2.bf16.msra.mxu0 %v1762
    %2056 = vmatprep.subr.bf16.mxu0 %v1759
    %2057 = vmatpush2.bf16.msra.mxu0 %v1758
    %2058 = vmatprep.subr.bf16.mxu0 %v1755
    %2059 = vmatpush2.bf16.msra.mxu0 %v1754
    %2060 = vmatprep.subr.bf16.mxu0 %v1751
    %2061 = vmatpush2.bf16.msra.mxu0 %v1750
    %2062 = vmatprep.subr.bf16.mxu0 %v1747
    %2063 = vmatpush2.bf16.msra.mxu0 %v1746
    %2064 = vmatprep.subr.bf16.mxu0 %v1743
    %2065 = vmatpush2.bf16.msra.mxu0 %v1742
    %2066 = vmatprep.subr.bf16.mxu0 %v1739
    %2067 = vmatpush2.bf16.msra.mxu0 %v1738
    %2068 = vmatprep.subr.bf16.mxu0 %v1735
    %2069 = vmatpush2.bf16.msra.mxu0 %v1734
    %2070 = vmatprep.mubr.bf16.mxu0 %v1163
    %2071 = vmatmul.mubr.bf16.gmra.mxu0 %v1162
    %v2072 = vpop.f32.mrf.mxu0
    %v2073 = vadd.f32 %v1307, %v2072
    %v2074 = vpop.f32.mrf.mxu0
    %v2075 = vadd.f32 %v1311, %v2074
    %v2076 = vpop.f32.mrf.mxu0
    %v2077 = vpop.f32.mrf.mxu0
    %2078 = vdwg.mxu0
    %2079 = vmatprep.subr.bf16.mxu0 %v1795
    %2080 = vmatpush1.bf16.msra.mxu0 %v1794
    %2081 = vmatprep.subr.bf16.mxu0 %v1791
    %2082 = vmatpush1.bf16.msra.mxu0 %v1790
    %2083 = vmatprep.subr.bf16.mxu0 %v1787
    %2084 = vmatpush1.bf16.msra.mxu0 %v1786
    %2085 = vmatprep.subr.bf16.mxu0 %v1783
    %2086 = vmatpush1.bf16.msra.mxu0 %v1782
    %2087 = vmatprep.subr.bf16.mxu0 %v1779
    %2088 = vmatpush1.bf16.msra.mxu0 %v1778
    %2089 = vmatprep.subr.bf16.mxu0 %v1775
    %2090 = vmatpush1.bf16.msra.mxu0 %v1774
    %2091 = vmatprep.subr.bf16.mxu0 %v1771
    %2092 = vmatpush1.bf16.msra.mxu0 %v1770
    %2093 = vmatprep.subr.bf16.mxu0 %v1767
    %2094 = vmatpush1.bf16.msra.mxu0 %v1766
    %2095 = vmatprep.subr.bf16.mxu0 %v1827
    %2096 = vmatpush2.bf16.msra.mxu0 %v1826
    %2097 = vmatprep.subr.bf16.mxu0 %v1823
    %2098 = vmatpush2.bf16.msra.mxu0 %v1822
    %2099 = vmatprep.subr.bf16.mxu0 %v1819
    %2100 = vmatpush2.bf16.msra.mxu0 %v1818
    %2101 = vmatprep.subr.bf16.mxu0 %v1815
    %2102 = vmatpush2.bf16.msra.mxu0 %v1814
    %2103 = vmatprep.subr.bf16.mxu0 %v1811
    %2104 = vmatpush2.bf16.msra.mxu0 %v1810
    %2105 = vmatprep.subr.bf16.mxu0 %v1807
    %2106 = vmatpush2.bf16.msra.mxu0 %v1806
    %2107 = vmatprep.subr.bf16.mxu0 %v1803
    %2108 = vmatpush2.bf16.msra.mxu0 %v1802
    %2109 = vmatprep.subr.bf16.mxu0 %v1799
    %2110 = vmatpush2.bf16.msra.mxu0 %v1798
    %2111 = vmatprep.mubr.bf16.mxu0 %v1165
    %2112 = vmatmul.mubr.bf16.gmra.mxu0 %v1164
    %v2113 = vpop.f32.mrf.mxu0
    %v2114 = vadd.f32 %v2073, %v2113
    %v2115 = vpop.f32.mrf.mxu0
    %v2116 = vadd.f32 %v2075, %v2115
    %v2117 = vpop.f32.mrf.mxu0
    %v2118 = vpop.f32.mrf.mxu0
    %2119 = vdwg.mxu0
    %v2120 = vpack.c.bf16 %v2032, %v2032
    %v2121 = vpack.c.bf16 %v2034, %v2034
    %v2122 = vpack.c.bf16 %v2114, %v2114
    %v2123 = vpack.c.bf16 %v2116, %v2116
    %v2124 = vtanh.bf16.pop %v2120
    %v2125 = vtanh.bf16.pop %v2121
    %v2126 = vtanh.bf16.pop %v2122
    %v2127 = vtanh.bf16.pop %v2123
    %v2128 = vld [vmem:[#allocation6] sm:$0xf]
    %v2129 = vld [vmem:[#allocation6 + $0x4] sm:$0xf]
    %v2130 = vld [vmem:[#allocation6 + $0x8] sm:$0xf]
    %v2131 = vld [vmem:[#allocation6 + $0xc] sm:$0xf]
    %v2132 = vld [vmem:[#allocation6 + $0x10] sm:$0xf]
    %v2133 = vld [vmem:[#allocation6 + $0x14] sm:$0xf]
    %v2134 = vld [vmem:[#allocation6 + $0x18] sm:$0xf]
    %v2135 = vld [vmem:[#allocation6 + $0x1c] sm:$0xf]
    %v2136 = vld [vmem:[#allocation6 + $0x20] sm:$0xf]
    %v2137 = vld [vmem:[#allocation6 + $0x24] sm:$0xf]
    %v2138 = vld [vmem:[#allocation6 + $0x28] sm:$0xf]
    %v2139 = vld [vmem:[#allocation6 + $0x2c] sm:$0xf]
    %v2140 = vld [vmem:[#allocation6 + $0x30] sm:$0xf]
    %v2141 = vld [vmem:[#allocation6 + $0x34] sm:$0xf]
    %v2142 = vld [vmem:[#allocation6 + $0x38] sm:$0xf]
    %v2143 = vld [vmem:[#allocation6 + $0x3c] sm:$0xf]
    %v2144 = vld [vmem:[#allocation6 + $0x40] sm:$0xf]
    %v2145 = vld [vmem:[#allocation6 + $0x44] sm:$0xf]
    %v2146 = vld [vmem:[#allocation6 + $0x48] sm:$0xf]
    %v2147 = vld [vmem:[#allocation6 + $0x4c] sm:$0xf]
    %v2148 = vld [vmem:[#allocation6 + $0x50] sm:$0xf]
    %v2149 = vld [vmem:[#allocation6 + $0x54] sm:$0xf]
    %v2150 = vld [vmem:[#allocation6 + $0x58] sm:$0xf]
    %v2151 = vld [vmem:[#allocation6 + $0x5c] sm:$0xf]
    %v2152 = vld [vmem:[#allocation6 + $0x60] sm:$0xf]
    %v2153 = vld [vmem:[#allocation6 + $0x64] sm:$0xf]
    %v2154 = vld [vmem:[#allocation6 + $0x68] sm:$0xf]
    %v2155 = vld [vmem:[#allocation6 + $0x6c] sm:$0xf]
    %v2156 = vld [vmem:[#allocation6 + $0x70] sm:$0xf]
    %v2157 = vld [vmem:[#allocation6 + $0x74] sm:$0xf]
    %v2158 = vld [vmem:[#allocation6 + $0x78] sm:$0xf]
    %v2159 = vld [vmem:[#allocation6 + $0x7c] sm:$0xf]
    %v2160 = vld [vmem:[#allocation6 + $0x80] sm:$0xf]
    %v2161 = vld [vmem:[#allocation6 + $0x84] sm:$0xf]
    %v2162 = vld [vmem:[#allocation6 + $0x88] sm:$0xf]
    %v2163 = vld [vmem:[#allocation6 + $0x8c] sm:$0xf]
    %v2164 = vld [vmem:[#allocation6 + $0x90] sm:$0xf]
    %v2165 = vld [vmem:[#allocation6 + $0x94] sm:$0xf]
    %v2166 = vld [vmem:[#allocation6 + $0x98] sm:$0xf]
    %v2167 = vld [vmem:[#allocation6 + $0x9c] sm:$0xf]
    %v2168 = vld [vmem:[#allocation6 + $0xa0] sm:$0xf]
    %v2169 = vld [vmem:[#allocation6 + $0xa4] sm:$0xf]
    %v2170 = vld [vmem:[#allocation6 + $0xa8] sm:$0xf]
    %v2171 = vld [vmem:[#allocation6 + $0xac] sm:$0xf]
    %v2172 = vld [vmem:[#allocation6 + $0xb0] sm:$0xf]
    %v2173 = vld [vmem:[#allocation6 + $0xb4] sm:$0xf]
    %v2174 = vld [vmem:[#allocation6 + $0xb8] sm:$0xf]
    %v2175 = vld [vmem:[#allocation6 + $0xbc] sm:$0xf]
    %v2176 = vld [vmem:[#allocation6 + $0xc0] sm:$0xf]
    %v2177 = vld [vmem:[#allocation6 + $0xc4] sm:$0xf]
    %v2178 = vld [vmem:[#allocation6 + $0xc8] sm:$0xf]
    %v2179 = vld [vmem:[#allocation6 + $0xcc] sm:$0xf]
    %v2180 = vld [vmem:[#allocation6 + $0xd0] sm:$0xf]
    %v2181 = vld [vmem:[#allocation6 + $0xd4] sm:$0xf]
    %v2182 = vld [vmem:[#allocation6 + $0xd8] sm:$0xf]
    %v2183 = vld [vmem:[#allocation6 + $0xdc] sm:$0xf]
    %v2184 = vld [vmem:[#allocation6 + $0xe0] sm:$0xf]
    %v2185 = vld [vmem:[#allocation6 + $0xe4] sm:$0xf]
    %v2186 = vld [vmem:[#allocation6 + $0xe8] sm:$0xf]
    %v2187 = vld [vmem:[#allocation6 + $0xec] sm:$0xf]
    %v2188 = vld [vmem:[#allocation6 + $0xf0] sm:$0xf]
    %v2189 = vld [vmem:[#allocation6 + $0xf4] sm:$0xf]
    %v2190 = vld [vmem:[#allocation6 + $0xf8] sm:$0xf]
    %v2191 = vld [vmem:[#allocation6 + $0xfc] sm:$0xf]
    %v2192 = vld [vmem:[%s8] sm:$0x1]
    %v2194 = vlaneseq
    %v2195 = vshrl.u32 %v2194, 7
    %v2196 = vsub.s32 0, %v2195
    %v2197 = vrot.slane %v2192, %v2196
    %v2263 = vunpack.c.l.b16 %v2128
    %v2264 = vunpack.c.l.b16 %v2129
    %v2265 = vunpack.c.l.b16 %v2130
    %v2266 = vunpack.c.l.b16 %v2131
    %v2267 = vunpack.c.l.b16 %v2132
    %v2268 = vunpack.c.l.b16 %v2133
    %v2269 = vunpack.c.l.b16 %v2134
    %v2270 = vunpack.c.l.b16 %v2135
    %v2271 = vunpack.c.l.b16 %v2136
    %v2272 = vunpack.c.l.b16 %v2137
    %v2273 = vunpack.c.l.b16 %v2138
    %v2274 = vunpack.c.l.b16 %v2139
    %v2275 = vunpack.c.l.b16 %v2140
    %v2276 = vunpack.c.l.b16 %v2141
    %v2277 = vunpack.c.l.b16 %v2142
    %v2278 = vunpack.c.l.b16 %v2143
    %v2279 = vunpack.c.l.b16 %v2144
    %v2280 = vunpack.c.l.b16 %v2145
    %v2281 = vunpack.c.l.b16 %v2146
    %v2282 = vunpack.c.l.b16 %v2147
    %v2283 = vunpack.c.l.b16 %v2148
    %v2284 = vunpack.c.l.b16 %v2149
    %v2285 = vunpack.c.l.b16 %v2150
    %v2286 = vunpack.c.l.b16 %v2151
    %v2287 = vunpack.c.l.b16 %v2152
    %v2288 = vunpack.c.l.b16 %v2153
    %v2289 = vunpack.c.l.b16 %v2154
    %v2290 = vunpack.c.l.b16 %v2155
    %v2291 = vunpack.c.l.b16 %v2156
    %v2292 = vunpack.c.l.b16 %v2157
    %v2293 = vunpack.c.l.b16 %v2158
    %v2294 = vunpack.c.l.b16 %v2159
    %v2295 = vunpack.c.l.b16 %v2160
    %v2296 = vunpack.c.l.b16 %v2161
    %v2297 = vunpack.c.l.b16 %v2162
    %v2298 = vunpack.c.l.b16 %v2163
    %v2299 = vunpack.c.l.b16 %v2164
    %v2300 = vunpack.c.l.b16 %v2165
    %v2301 = vunpack.c.l.b16 %v2166
    %v2302 = vunpack.c.l.b16 %v2167
    %v2303 = vunpack.c.l.b16 %v2168
    %v2304 = vunpack.c.l.b16 %v2169
    %v2305 = vunpack.c.l.b16 %v2170
    %v2306 = vunpack.c.l.b16 %v2171
    %v2307 = vunpack.c.l.b16 %v2172
    %v2308 = vunpack.c.l.b16 %v2173
    %v2309 = vunpack.c.l.b16 %v2174
    %v2310 = vunpack.c.l.b16 %v2175
    %v2311 = vunpack.c.l.b16 %v2176
    %v2312 = vunpack.c.l.b16 %v2177
    %v2313 = vunpack.c.l.b16 %v2178
    %v2314 = vunpack.c.l.b16 %v2179
    %v2315 = vunpack.c.l.b16 %v2180
    %v2316 = vunpack.c.l.b16 %v2181
    %v2317 = vunpack.c.l.b16 %v2182
    %v2318 = vunpack.c.l.b16 %v2183
    %v2319 = vunpack.c.l.b16 %v2184
    %v2320 = vunpack.c.l.b16 %v2185
    %v2321 = vunpack.c.l.b16 %v2186
    %v2322 = vunpack.c.l.b16 %v2187
    %v2323 = vunpack.c.l.b16 %v2188
    %v2324 = vunpack.c.l.b16 %v2189
    %v2325 = vunpack.c.l.b16 %v2190
    %v2326 = vunpack.c.l.b16 %v2191
    %v2327 = vpack.c.b16 %v2264, %v2263
    %v2328 = vpack.c.b16 %v2266, %v2265
    %v2329 = vpack.c.b16 %v2268, %v2267
    %v2330 = vpack.c.b16 %v2270, %v2269
    %v2331 = vpack.c.b16 %v2272, %v2271
    %v2332 = vpack.c.b16 %v2274, %v2273
    %v2333 = vpack.c.b16 %v2276, %v2275
    %v2334 = vpack.c.b16 %v2278, %v2277
    %v2335 = vpack.c.b16 %v2280, %v2279
    %v2336 = vpack.c.b16 %v2282, %v2281
    %v2337 = vpack.c.b16 %v2284, %v2283
    %v2338 = vpack.c.b16 %v2286, %v2285
    %v2339 = vpack.c.b16 %v2288, %v2287
    %v2340 = vpack.c.b16 %v2290, %v2289
    %v2341 = vpack.c.b16 %v2292, %v2291
    %v2342 = vpack.c.b16 %v2294, %v2293
    %v2343 = vpack.c.b16 %v2296, %v2295
    %v2344 = vpack.c.b16 %v2298, %v2297
    %v2345 = vpack.c.b16 %v2300, %v2299
    %v2346 = vpack.c.b16 %v2302, %v2301
    %v2347 = vpack.c.b16 %v2304, %v2303
    %v2348 = vpack.c.b16 %v2306, %v2305
    %v2349 = vpack.c.b16 %v2308, %v2307
    %v2350 = vpack.c.b16 %v2310, %v2309
    %v2351 = vpack.c.b16 %v2312, %v2311
    %v2352 = vpack.c.b16 %v2314, %v2313
    %v2353 = vpack.c.b16 %v2316, %v2315
    %v2354 = vpack.c.b16 %v2318, %v2317
    %v2355 = vpack.c.b16 %v2320, %v2319
    %v2356 = vpack.c.b16 %v2322, %v2321
    %v2357 = vpack.c.b16 %v2324, %v2323
    %v2358 = vpack.c.b16 %v2326, %v2325
    %2391 = vmatprep.subr.bf16.mxu0 0
    %2392 = vmatpush1.bf16.msra.mxu0 %v2334
    %2393 = vmatprep.subr.bf16.mxu0 0
    %2394 = vmatpush1.bf16.msra.mxu0 %v2333
    %2395 = vmatprep.subr.bf16.mxu0 0
    %2396 = vmatpush1.bf16.msra.mxu0 %v2332
    %2397 = vmatprep.subr.bf16.mxu0 0
    %2398 = vmatpush1.bf16.msra.mxu0 %v2331
    %2399 = vmatprep.subr.bf16.mxu0 0
    %2400 = vmatpush1.bf16.msra.mxu0 %v2330
    %2401 = vmatprep.subr.bf16.mxu0 0
    %2402 = vmatpush1.bf16.msra.mxu0 %v2329
    %2403 = vmatprep.subr.bf16.mxu0 0
    %2404 = vmatpush1.bf16.msra.mxu0 %v2328
    %2405 = vmatprep.subr.bf16.mxu0 0
    %2406 = vmatpush1.bf16.msra.mxu0 %v2327
    %2407 = vmatprep.subr.bf16.mxu0 0
    %2408 = vmatpush2.bf16.msra.mxu0 %v2342
    %2409 = vmatprep.subr.bf16.mxu0 0
    %2410 = vmatpush2.bf16.msra.mxu0 %v2341
    %2411 = vmatprep.subr.bf16.mxu0 0
    %2412 = vmatpush2.bf16.msra.mxu0 %v2340
    %2413 = vmatprep.subr.bf16.mxu0 0
    %2414 = vmatpush2.bf16.msra.mxu0 %v2339
    %2415 = vmatprep.subr.bf16.mxu0 0
    %2416 = vmatpush2.bf16.msra.mxu0 %v2338
    %2417 = vmatprep.subr.bf16.mxu0 0
    %2418 = vmatpush2.bf16.msra.mxu0 %v2337
    %2419 = vmatprep.subr.bf16.mxu0 0
    %2420 = vmatpush2.bf16.msra.mxu0 %v2336
    %2421 = vmatprep.subr.bf16.mxu0 0
    %2422 = vmatpush2.bf16.msra.mxu0 %v2335
    %2423 = vmatprep.mubr.bf16.mxu0 %v2125
    %2424 = vmatmul.mubr.bf16.gmra.mxu0 %v2124
    %v2425 = vpop.f32.mrf.mxu0
    %v2426 = vadd.f32 %v2197, %v2425
    %v2427 = vpop.f32.mrf.mxu0
    %v2428 = vpop.f32.mrf.mxu0
    %v2429 = vpop.f32.mrf.mxu0
    %2430 = vdwg.mxu0
    %2431 = vmatprep.subr.bf16.mxu0 0
    %2432 = vmatpush1.bf16.msra.mxu0 %v2350
    %2433 = vmatprep.subr.bf16.mxu0 0
    %2434 = vmatpush1.bf16.msra.mxu0 %v2349
    %2435 = vmatprep.subr.bf16.mxu0 0
    %2436 = vmatpush1.bf16.msra.mxu0 %v2348
    %2437 = vmatprep.subr.bf16.mxu0 0
    %2438 = vmatpush1.bf16.msra.mxu0 %v2347
    %2439 = vmatprep.subr.bf16.mxu0 0
    %2440 = vmatpush1.bf16.msra.mxu0 %v2346
    %2441 = vmatprep.subr.bf16.mxu0 0
    %2442 = vmatpush1.bf16.msra.mxu0 %v2345
    %2443 = vmatprep.subr.bf16.mxu0 0
    %2444 = vmatpush1.bf16.msra.mxu0 %v2344
    %2445 = vmatprep.subr.bf16.mxu0 0
    %2446 = vmatpush1.bf16.msra.mxu0 %v2343
    %2447 = vmatprep.subr.bf16.mxu0 0
    %2448 = vmatpush2.bf16.msra.mxu0 %v2358
    %2449 = vmatprep.subr.bf16.mxu0 0
    %2450 = vmatpush2.bf16.msra.mxu0 %v2357
    %2451 = vmatprep.subr.bf16.mxu0 0
    %2452 = vmatpush2.bf16.msra.mxu0 %v2356
    %2453 = vmatprep.subr.bf16.mxu0 0
    %2454 = vmatpush2.bf16.msra.mxu0 %v2355
    %2455 = vmatprep.subr.bf16.mxu0 0
    %2456 = vmatpush2.bf16.msra.mxu0 %v2354
    %2457 = vmatprep.subr.bf16.mxu0 0
    %2458 = vmatpush2.bf16.msra.mxu0 %v2353
    %2459 = vmatprep.subr.bf16.mxu0 0
    %2460 = vmatpush2.bf16.msra.mxu0 %v2352
    %2461 = vmatprep.subr.bf16.mxu0 0
    %2462 = vmatpush2.bf16.msra.mxu0 %v2351
    %2463 = vmatprep.mubr.bf16.mxu0 %v2127
    %2464 = vmatmul.mubr.bf16.gmra.mxu0 %v2126
    %v2465 = vpop.f32.mrf.mxu0
    %v2466 = vadd.f32 %v2426, %v2465
    %v2467 = vpop.f32.mrf.mxu0
    %v2468 = vpop.f32.mrf.mxu0
    %v2469 = vpop.f32.mrf.mxu0
    %2470 = vdwg.mxu0
    %2471 = vst [vmem:[%s9] sm:$0xff] %v2466
    // Predicated region
    $region50: #{generator_forward.1} parent=1 // pred_check
      _
    $region51: #{generator_forward.1} parent=1 // pred_check_branch
      %2473 = sbr.rel (0) target = $region53
    $region52: #{generator_forward.1} parent=1 // pred_region
      _
    $region53: #{generator_forward.1} parent=1 // pred_fallthru
      _
    // Predicated region
    $region54: #{generator_forward.1} parent=1 // pred_check
      _
    $region55: #{generator_forward.1} parent=1 // pred_check_branch
      %2475 = sbr.rel (0) target = $region57
    $region56: #{generator_forward.1} parent=1 // pred_region
      _
    $region57: #{generator_forward.1} parent=1 // pred_fallthru
      _
    %2476 = vsyncpa [#allocation3], 1
    %2477 = vsyncpa [#allocation5], 1

</llo_original>
